<compile_context>
chip_gen: v7x
topology: tpu7x:2x2x1
jax: 0.10.0
libtpu: 0.0.40
codegen_flags: <defaults>
</compile_context>

<pallas_src>
import functools

import jax
import jax.numpy as jnp
from jax.experimental import pallas as pl
from jax.experimental.pallas import tpu as pltpu


def kronecker_attn_kernel(x_ref, pool_ref, expand_ref, wqkv_ref, wout_ref, bout_ref,
                          o_ref, *, heads, dim_heads, tb, channels):
    hidden = heads * dim_heads
    n = pool_ref.shape[-1]            # H + W

    pool = pool_ref[...]              # (HW, n)       x dtype (bf16-friendly MXU path)
    expand = expand_ref[...]          # (n, HW)       f32
    wqkv_t = wqkv_ref[...]            # (C, 3*hidden) f32, lane-dense
    wout = wout_ref[...]              # (C, hidden)   f32
    bias = bout_ref[...]              # (C, 1)        f32

    # ---- Kronecker pooling for all tb batches in ONE MXU matmul:
    #      (tb*C, HW) @ (HW, n) -> (tb*C, n), f32 accumulation.
    xn_all = jnp.dot(x_ref[...], pool, preferred_element_type=jnp.float32)

    out_rows = []
    for b in range(tb):               # tb is small, static and capped -> bounded unroll
        xn_b = xn_all[b * channels:(b + 1) * channels, :]             # (C, n)

        # QKV projection (bias-free), contracting over C: (3*hidden, n).
        qkv_t = jax.lax.dot_general(wqkv_t, xn_b, (((0,), (0,)), ((), ())),
                                    preferred_element_type=jnp.float32)

        # Per-head logits stacked along sublanes -> a single softmax per batch.
        dots = []
        for hi in range(heads):
            lo = hi * dim_heads
            q_h = qkv_t[lo:lo + dim_heads]                            # (d, n)
            k_h = qkv_t[hidden + lo:hidden + lo + dim_heads]          # (d, n)
            # dots[i, j] = sum_d q[d, i] * k[d, j]  (no 1/sqrt(d) scaling, as in ref)
            dots.append(jax.lax.dot_general(q_h, k_h, (((0,), (0,)), ((), ())),
                                            preferred_element_type=jnp.float32))
        dots_all = dots[0] if heads == 1 else jnp.concatenate(dots, axis=0)   # (heads*n, n)

        dots_all = dots_all - jnp.max(dots_all, axis=-1, keepdims=True)
        p = jnp.exp(dots_all)
        attn_all = p * pl.reciprocal(jnp.sum(p, axis=-1, keepdims=True), approx=True)

        # attn @ v per head in (d, n) orientation, stacked to (hidden, n);
        # then ONE K=hidden output-projection matmul per batch.
        outs = []
        for hi in range(heads):
            lo = hi * dim_heads
            v_h = qkv_t[2 * hidden + lo:2 * hidden + lo + dim_heads]  # (d, n)
            attn_h = attn_all[hi * n:(hi + 1) * n]                    # (n, n)
            outs.append(jax.lax.dot_general(v_h, attn_h, (((1,), (1,)), ((), ())),
                                            preferred_element_type=jnp.float32))   # (d, n)
        out_hn = outs[0] if heads == 1 else jnp.concatenate(outs, axis=0)     # (hidden, n)

        out_cn = jnp.dot(wout, out_hn, preferred_element_type=jnp.float32)    # (C, n)
        out_rows.append(out_cn + bias)    # bias is doubled by `expand` below (as in ref)

    out_all = out_rows[0] if tb == 1 else jnp.concatenate(out_rows, axis=0)   # (tb*C, n)

    # ---- Kronecker (outer) sum for all tb batches in ONE MXU matmul and a single
    #      lane-dense full-tile store: res[c, h*W + w] = out[c, h] + out[c, H + w].
    res = jnp.dot(out_all, expand, preferred_element_type=jnp.float32)        # (tb*C, HW)
    o_ref[...] = res.astype(o_ref.dtype)


def _vmem_capacity_bytes():
    try:
        cap = getattr(pltpu.get_tpu_info(), "vmem_capacity_bytes", None)
        if cap:
            return int(cap)
    except Exception:
        pass
    return 128 * 1024 * 1024


def _select_tb(B, C, HW, itemsize, budget):
    divisors = [d for d in range(1, B + 1) if B % d == 0]

    def aligned(tb):          # keep the block's second-minor dim sublane-aligned
        return (tb * C) % 8 == 0 or tb == B

    def fits(tb):             # double-buffered x block + out block per grid step
        return 2 * 2 * tb * C * HW * itemsize <= budget

    cands = [d for d in divisors if d <= 8 and aligned(d) and fits(d)]
    multi = [d for d in cands if B // d >= 2]       # prefer >= 2 grid steps (megacore)
    for group in (multi, cands):
        if group:
            return max(group)
    loose = [d for d in divisors if d <= 8 and aligned(d)]
    return max(loose) if loose else B


def kronecker_self_attention(x, w_qkv, w_out, b_out, *, heads, dim_heads,
                             tb=None, vmem_limit_bytes=None):
    B, C, H, W = x.shape
    hidden = heads * dim_heads
    n = H + W
    HW = H * W
    assert w_qkv.shape == (3 * hidden, C)
    assert w_out.shape == (C, hidden)

    # Generation-aware VMEM budgeting (v7x: 64 MiB / TC, v5e/v6e: 128 MiB).
    cap = _vmem_capacity_bytes()
    if vmem_limit_bytes is None:
        vmem_limit_bytes = int(min(64 * 1024 * 1024, cap // 2))
    block_budget = max(2 * 1024 * 1024, vmem_limit_bytes // 2)

    if tb is None:
        tb = _select_tb(B, C, HW, jnp.dtype(x.dtype).itemsize, block_budget)
    assert B % tb == 0

    # Lane-dense flat layout; batch folded into the row (M) dim.  Contiguous -> free.
    x_flat = x.reshape(B * C, HW)

    # Small parameters upcast to f32 (tiny); the big x tensor keeps its own dtype.
    w_qkv_t = jnp.transpose(w_qkv).astype(jnp.float32)       # (C, 3*hidden), lane-dense
    w_out_f = w_out.astype(jnp.float32)                      # (C, hidden)
    b_out2d = b_out.reshape(C, 1).astype(jnp.float32)

    # Constant pooling / expansion matrices.
    h_idx = jnp.arange(HW, dtype=jnp.int32) // W             # flat position -> h
    w_idx = jnp.arange(HW, dtype=jnp.int32) % W              # flat position -> w
    i_idx = jnp.arange(n, dtype=jnp.int32)
    # pool[p, i]: i < H averages over W (picks h == i); i >= H averages over H (w == i-H)
    pool = ((i_idx[None, :] == h_idx[:, None]).astype(jnp.float32) / W
            + (i_idx[None, :] - H == w_idx[:, None]).astype(jnp.float32) / H)   # (HW, n)
    pool = pool.astype(x.dtype)
    # expand[i, p]: broadcasts the H-part along w and the W-part along h (Kronecker sum)
    expand = ((i_idx[:, None] == h_idx[None, :]).astype(jnp.float32)
              + (i_idx[:, None] - H == w_idx[None, :]).astype(jnp.float32))     # (n, HW)

    kern = functools.partial(kronecker_attn_kernel, heads=heads, dim_heads=dim_heads,
                             tb=tb, channels=C)

    out_flat = pl.pallas_call(
        kern,
        out_shape=jax.ShapeDtypeStruct((B * C, HW), x.dtype),
        grid_spec=pltpu.PrefetchScalarGridSpec(
            num_scalar_prefetch=0,
            grid=(B // tb,),
            in_specs=[
                pl.BlockSpec((tb * C, HW), lambda b: (b, 0)),
                pl.BlockSpec((HW, n), lambda b: (0, 0)),
                pl.BlockSpec((n, HW), lambda b: (0, 0)),
                pl.BlockSpec((C, 3 * hidden), lambda b: (0, 0)),
                pl.BlockSpec((C, hidden), lambda b: (0, 0)),
                pl.BlockSpec((C, 1), lambda b: (0, 0)),
            ],
            out_specs=pl.BlockSpec((tb * C, HW), lambda b: (b, 0)),
        ),
        compiler_params=pltpu.CompilerParams(
            dimension_semantics=("parallel",),
            vmem_limit_bytes=vmem_limit_bytes),
    )(x_flat, pool, expand, w_qkv_t, w_out_f, b_out2d)

    return out_flat.reshape(B, C, H, W)


def reference(x, w_qkv, w_out, b_out, *, heads, dim_heads):
    # Pure-JAX transcription of the PyTorch forward for verification.
    B, C, H, W = x.shape
    hidden = heads * dim_heads
    xn = jnp.concatenate([x.mean(-1), x.mean(-2)], axis=-1)        # (B, C, n)
    xn = jnp.transpose(xn, (0, 2, 1))                              # (B, n, C)
    qkv = xn @ w_qkv.T                                             # (B, n, 3*hidden)
    q, k, v = jnp.split(qkv, 3, axis=-1)

    def split_heads(t):
        return t.reshape(B, -1, heads, dim_heads).transpose(0, 2, 1, 3)

    q, k, v = map(split_heads, (q, k, v))
    dots = jnp.einsum('bhid,bhjd->bhij', q, k)
    attn = jax.nn.softmax(dots, axis=-1)
    out = jnp.einsum('bhij,bhjd->bhid', attn, v)
    out = out.transpose(0, 2, 1, 3).reshape(B, -1, hidden)
    out = out @ w_out.T + b_out.reshape(1, 1, C)
    out = out.transpose(0, 2, 1)                                   # (B, C, n)
    return out[..., :H][..., :, None] + out[..., H:][..., None, :]


if __name__ == "__main__":
    B, dim, H, W = 2, 4, 16, 16
    heads, dim_heads = 2, 32
    hidden = heads * dim_heads

    key = jax.random.PRNGKey(0)
    kx, kq, kw, kb = jax.random.split(key, 4)

    x = jax.random.normal(kx, (B, dim, H, W), dtype=jnp.float32)
    # Deterministic synthetic parameters (PyTorch-layout weight shapes).
    w_qkv = jax.random.normal(kq, (3 * hidden, dim), dtype=jnp.float32) / jnp.sqrt(dim)
    w_out = jax.random.normal(kw, (dim, hidden), dtype=jnp.float32) / jnp.sqrt(hidden)
    b_out = 0.1 * jax.random.normal(kb, (dim,), dtype=jnp.float32)

    out = kronecker_self_attention(x, w_qkv, w_out, b_out,
                                   heads=heads, dim_heads=dim_heads)
    out = jax.block_until_ready(out)

    ref = reference(x, w_qkv, w_out, b_out, heads=heads, dim_heads=dim_heads)
    assert out.shape == (B, dim, H, W)
    assert jnp.allclose(out, ref, atol=2e-2, rtol=2e-2)

    print("KERNEL_OK")
</pallas_src>

<mosaic_0001>
module attributes {stable_mosaic.version = 11 : i64} {
  func.func @kronecker_attn_kernel(%arg0: i32, %arg1: memref<8x256xf32, #tpu.memory_space<vmem>>, %arg2: memref<256x32xf32, #tpu.memory_space<vmem>>, %arg3: memref<32x256xf32, #tpu.memory_space<vmem>>, %arg4: memref<4x192xf32, #tpu.memory_space<vmem>>, %arg5: memref<4x64xf32, #tpu.memory_space<vmem>>, %arg6: memref<4x1xf32, #tpu.memory_space<vmem>>, %arg7: memref<8x256xf32, #tpu.memory_space<vmem>>) attributes {dimension_semantics = [#tpu.dimension_semantics<parallel>], iteration_bounds = array<i64: 1>, scalar_prefetch = 0 : i64, scratch_operands = 0 : i64, tpu.core_type = #tpu.core_type<tc>, window_params = [{transform_indices = @transform_0, window_bounds = array<i64: 8, 256>}, {pipeline_mode = #tpu.pipeline_mode<synchronous>, transform_indices = @transform_1, window_bounds = array<i64: 256, 32>}, {pipeline_mode = #tpu.pipeline_mode<synchronous>, transform_indices = @transform_2, window_bounds = array<i64: 32, 256>}, {pipeline_mode = #tpu.pipeline_mode<synchronous>, transform_indices = @transform_3, window_bounds = array<i64: 4, 192>}, {pipeline_mode = #tpu.pipeline_mode<synchronous>, transform_indices = @transform_4, window_bounds = array<i64: 4, 64>}, {pipeline_mode = #tpu.pipeline_mode<synchronous>, transform_indices = @transform_5, window_bounds = array<i64: 4, 1>}, {transform_indices = @transform_6, window_bounds = array<i64: 8, 256>}]} {
    %c0 = arith.constant 0 : index
    %c0_0 = arith.constant 0 : index
    %0 = vector.load %arg2[%c0, %c0_0] : memref<256x32xf32, #tpu.memory_space<vmem>>, vector<256x32xf32>
    %c0_1 = arith.constant 0 : index
    %c0_2 = arith.constant 0 : index
    %1 = vector.load %arg3[%c0_1, %c0_2] : memref<32x256xf32, #tpu.memory_space<vmem>>, vector<32x256xf32>
    %c0_3 = arith.constant 0 : index
    %c0_4 = arith.constant 0 : index
    %2 = vector.load %arg4[%c0_3, %c0_4] : memref<4x192xf32, #tpu.memory_space<vmem>>, vector<4x192xf32>
    %c0_5 = arith.constant 0 : index
    %c0_6 = arith.constant 0 : index
    %3 = vector.load %arg5[%c0_5, %c0_6] : memref<4x64xf32, #tpu.memory_space<vmem>>, vector<4x64xf32>
    %c0_7 = arith.constant 0 : index
    %c0_8 = arith.constant 0 : index
    %4 = vector.load %arg6[%c0_7, %c0_8] : memref<4x1xf32, #tpu.memory_space<vmem>>, vector<4x1xf32>
    %c0_9 = arith.constant 0 : index
    %c0_10 = arith.constant 0 : index
    %5 = vector.load %arg1[%c0_9, %c0_10] : memref<8x256xf32, #tpu.memory_space<vmem>>, vector<8x256xf32>
    %cst = arith.constant dense<0.000000e+00> : vector<8x32xf32>
    %6 = tpu.matmul %5, %0, %cst {dimension_numbers = #tpu.dot_dimension_numbers<[1], [0], [0], [1], [0, 0, 1, 1], [], []>} : vector<8x256xf32>, vector<256x32xf32>, vector<8x32xf32> -> vector<8x32xf32>
    %7 = vector.extract_strided_slice %6 {offsets = [0, 0], sizes = [4, 32], strides = [1, 1]} : vector<8x32xf32> to vector<4x32xf32>
    %cst_11 = arith.constant dense<0.000000e+00> : vector<192x32xf32>
    %8 = tpu.matmul %2, %7, %cst_11 {dimension_numbers = #tpu.dot_dimension_numbers<[0], [0], [1], [1], [0, 1, 1, 1], [], []>} : vector<4x192xf32>, vector<4x32xf32>, vector<192x32xf32> -> vector<192x32xf32>
    %9 = vector.extract_strided_slice %8 {offsets = [0, 0], sizes = [32, 32], strides = [1, 1]} : vector<192x32xf32> to vector<32x32xf32>
    %10 = vector.extract_strided_slice %8 {offsets = [64, 0], sizes = [32, 32], strides = [1, 1]} : vector<192x32xf32> to vector<32x32xf32>
    %cst_12 = arith.constant dense<0.000000e+00> : vector<32x32xf32>
    %11 = tpu.matmul %9, %10, %cst_12 {dimension_numbers = #tpu.dot_dimension_numbers<[0], [0], [1], [1], [0, 1, 1, 1], [], []>} : vector<32x32xf32>, vector<32x32xf32>, vector<32x32xf32> -> vector<32x32xf32>
    %12 = vector.extract_strided_slice %8 {offsets = [32, 0], sizes = [32, 32], strides = [1, 1]} : vector<192x32xf32> to vector<32x32xf32>
    %13 = vector.extract_strided_slice %8 {offsets = [96, 0], sizes = [32, 32], strides = [1, 1]} : vector<192x32xf32> to vector<32x32xf32>
    %cst_13 = arith.constant dense<0.000000e+00> : vector<32x32xf32>
    %14 = tpu.matmul %12, %13, %cst_13 {dimension_numbers = #tpu.dot_dimension_numbers<[0], [0], [1], [1], [0, 1, 1, 1], [], []>} : vector<32x32xf32>, vector<32x32xf32>, vector<32x32xf32> -> vector<32x32xf32>
    %15 = tpu.concatenate %11, %14 in 0 : vector<32x32xf32>, vector<32x32xf32> -> vector<64x32xf32>
    %cst_14 = arith.constant dense<0xFF800000> : vector<64xf32>
    %16 = vector.multi_reduction <maximumf>, %15, %cst_14 [1] : vector<64x32xf32> to vector<64xf32>
    %17 = vector.shape_cast %16 : vector<64xf32> to vector<64x1xf32>
    %18 = vector.broadcast %17 : vector<64x1xf32> to vector<64x32xf32>
    %19 = arith.subf %15, %18 : vector<64x32xf32>
    %20 = math.exp %19 : vector<64x32xf32>
    %cst_15 = arith.constant dense<0.000000e+00> : vector<64xf32>
    %21 = vector.multi_reduction <add>, %20, %cst_15 [1] : vector<64x32xf32> to vector<64xf32>
    %22 = vector.shape_cast %21 : vector<64xf32> to vector<64x1xf32>
    %23 = tpu.reciprocal %22 {approx = true} : vector<64x1xf32> -> vector<64x1xf32>
    %24 = vector.broadcast %23 : vector<64x1xf32> to vector<64x32xf32>
    %25 = arith.mulf %20, %24 : vector<64x32xf32>
    %26 = vector.extract_strided_slice %8 {offsets = [128, 0], sizes = [32, 32], strides = [1, 1]} : vector<192x32xf32> to vector<32x32xf32>
    %27 = vector.extract_strided_slice %25 {offsets = [0, 0], sizes = [32, 32], strides = [1, 1]} : vector<64x32xf32> to vector<32x32xf32>
    %cst_16 = arith.constant dense<0.000000e+00> : vector<32x32xf32>
    %28 = tpu.matmul %26, %27, %cst_16 {dimension_numbers = #tpu.dot_dimension_numbers<[1], [1], [0], [0], [0, 0, 1, 0], [], []>} : vector<32x32xf32>, vector<32x32xf32>, vector<32x32xf32> -> vector<32x32xf32>
    %29 = vector.extract_strided_slice %8 {offsets = [160, 0], sizes = [32, 32], strides = [1, 1]} : vector<192x32xf32> to vector<32x32xf32>
    %30 = vector.extract_strided_slice %25 {offsets = [32, 0], sizes = [32, 32], strides = [1, 1]} : vector<64x32xf32> to vector<32x32xf32>
    %cst_17 = arith.constant dense<0.000000e+00> : vector<32x32xf32>
    %31 = tpu.matmul %29, %30, %cst_17 {dimension_numbers = #tpu.dot_dimension_numbers<[1], [1], [0], [0], [0, 0, 1, 0], [], []>} : vector<32x32xf32>, vector<32x32xf32>, vector<32x32xf32> -> vector<32x32xf32>
    %32 = tpu.concatenate %28, %31 in 0 : vector<32x32xf32>, vector<32x32xf32> -> vector<64x32xf32>
    %cst_18 = arith.constant dense<0.000000e+00> : vector<4x32xf32>
    %33 = tpu.matmul %3, %32, %cst_18 {dimension_numbers = #tpu.dot_dimension_numbers<[1], [0], [0], [1], [0, 0, 1, 1], [], []>} : vector<4x64xf32>, vector<64x32xf32>, vector<4x32xf32> -> vector<4x32xf32>
    %34 = vector.broadcast %4 : vector<4x1xf32> to vector<4x32xf32>
    %35 = arith.addf %33, %34 : vector<4x32xf32>
    %36 = vector.extract_strided_slice %6 {offsets = [4, 0], sizes = [4, 32], strides = [1, 1]} : vector<8x32xf32> to vector<4x32xf32>
    %cst_19 = arith.constant dense<0.000000e+00> : vector<192x32xf32>
    %37 = tpu.matmul %2, %36, %cst_19 {dimension_numbers = #tpu.dot_dimension_numbers<[0], [0], [1], [1], [0, 1, 1, 1], [], []>} : vector<4x192xf32>, vector<4x32xf32>, vector<192x32xf32> -> vector<192x32xf32>
    %38 = vector.extract_strided_slice %37 {offsets = [0, 0], sizes = [32, 32], strides = [1, 1]} : vector<192x32xf32> to vector<32x32xf32>
    %39 = vector.extract_strided_slice %37 {offsets = [64, 0], sizes = [32, 32], strides = [1, 1]} : vector<192x32xf32> to vector<32x32xf32>
    %cst_20 = arith.constant dense<0.000000e+00> : vector<32x32xf32>
    %40 = tpu.matmul %38, %39, %cst_20 {dimension_numbers = #tpu.dot_dimension_numbers<[0], [0], [1], [1], [0, 1, 1, 1], [], []>} : vector<32x32xf32>, vector<32x32xf32>, vector<32x32xf32> -> vector<32x32xf32>
    %41 = vector.extract_strided_slice %37 {offsets = [32, 0], sizes = [32, 32], strides = [1, 1]} : vector<192x32xf32> to vector<32x32xf32>
    %42 = vector.extract_strided_slice %37 {offsets = [96, 0], sizes = [32, 32], strides = [1, 1]} : vector<192x32xf32> to vector<32x32xf32>
    %cst_21 = arith.constant dense<0.000000e+00> : vector<32x32xf32>
    %43 = tpu.matmul %41, %42, %cst_21 {dimension_numbers = #tpu.dot_dimension_numbers<[0], [0], [1], [1], [0, 1, 1, 1], [], []>} : vector<32x32xf32>, vector<32x32xf32>, vector<32x32xf32> -> vector<32x32xf32>
    %44 = tpu.concatenate %40, %43 in 0 : vector<32x32xf32>, vector<32x32xf32> -> vector<64x32xf32>
    %cst_22 = arith.constant dense<0xFF800000> : vector<64xf32>
    %45 = vector.multi_reduction <maximumf>, %44, %cst_22 [1] : vector<64x32xf32> to vector<64xf32>
    %46 = vector.shape_cast %45 : vector<64xf32> to vector<64x1xf32>
    %47 = vector.broadcast %46 : vector<64x1xf32> to vector<64x32xf32>
    %48 = arith.subf %44, %47 : vector<64x32xf32>
    %49 = math.exp %48 : vector<64x32xf32>
    %cst_23 = arith.constant dense<0.000000e+00> : vector<64xf32>
    %50 = vector.multi_reduction <add>, %49, %cst_23 [1] : vector<64x32xf32> to vector<64xf32>
    %51 = vector.shape_cast %50 : vector<64xf32> to vector<64x1xf32>
    %52 = tpu.reciprocal %51 {approx = true} : vector<64x1xf32> -> vector<64x1xf32>
    %53 = vector.broadcast %52 : vector<64x1xf32> to vector<64x32xf32>
    %54 = arith.mulf %49, %53 : vector<64x32xf32>
    %55 = vector.extract_strided_slice %37 {offsets = [128, 0], sizes = [32, 32], strides = [1, 1]} : vector<192x32xf32> to vector<32x32xf32>
    %56 = vector.extract_strided_slice %54 {offsets = [0, 0], sizes = [32, 32], strides = [1, 1]} : vector<64x32xf32> to vector<32x32xf32>
    %cst_24 = arith.constant dense<0.000000e+00> : vector<32x32xf32>
    %57 = tpu.matmul %55, %56, %cst_24 {dimension_numbers = #tpu.dot_dimension_numbers<[1], [1], [0], [0], [0, 0, 1, 0], [], []>} : vector<32x32xf32>, vector<32x32xf32>, vector<32x32xf32> -> vector<32x32xf32>
    %58 = vector.extract_strided_slice %37 {offsets = [160, 0], sizes = [32, 32], strides = [1, 1]} : vector<192x32xf32> to vector<32x32xf32>
    %59 = vector.extract_strided_slice %54 {offsets = [32, 0], sizes = [32, 32], strides = [1, 1]} : vector<64x32xf32> to vector<32x32xf32>
    %cst_25 = arith.constant dense<0.000000e+00> : vector<32x32xf32>
    %60 = tpu.matmul %58, %59, %cst_25 {dimension_numbers = #tpu.dot_dimension_numbers<[1], [1], [0], [0], [0, 0, 1, 0], [], []>} : vector<32x32xf32>, vector<32x32xf32>, vector<32x32xf32> -> vector<32x32xf32>
    %61 = tpu.concatenate %57, %60 in 0 : vector<32x32xf32>, vector<32x32xf32> -> vector<64x32xf32>
    %cst_26 = arith.constant dense<0.000000e+00> : vector<4x32xf32>
    %62 = tpu.matmul %3, %61, %cst_26 {dimension_numbers = #tpu.dot_dimension_numbers<[1], [0], [0], [1], [0, 0, 1, 1], [], []>} : vector<4x64xf32>, vector<64x32xf32>, vector<4x32xf32> -> vector<4x32xf32>
    %63 = vector.broadcast %4 : vector<4x1xf32> to vector<4x32xf32>
    %64 = arith.addf %62, %63 : vector<4x32xf32>
    %65 = tpu.concatenate %35, %64 in 0 : vector<4x32xf32>, vector<4x32xf32> -> vector<8x32xf32>
    %cst_27 = arith.constant dense<0.000000e+00> : vector<8x256xf32>
    %66 = tpu.matmul %65, %1, %cst_27 {dimension_numbers = #tpu.dot_dimension_numbers<[1], [0], [0], [1], [0, 0, 1, 1], [], []>} : vector<8x32xf32>, vector<32x256xf32>, vector<8x256xf32> -> vector<8x256xf32>
    %c0_28 = arith.constant 0 : index
    %c0_29 = arith.constant 0 : index
    %67 = vector.load %arg7[%c0_28, %c0_29] : memref<8x256xf32, #tpu.memory_space<vmem>>, vector<8x256xf32>
    tpu.vector_store %arg7[%c0_28, %c0_29], %66 {strides = array<i32>} : memref<8x256xf32, #tpu.memory_space<vmem>>, vector<8x256xf32>,
    return
  }
  func.func @transform_0(%arg0: i32) -> (i32, i32) {
    %c0_i32 = arith.constant 0 : i32
    %c0_i32_0 = arith.constant 0 : i32
    return %arg0, %c0_i32 : i32, i32
  }
  func.func @transform_1(%arg0: i32) -> (i32, i32) {
    %c0_i32 = arith.constant 0 : i32
    %c0_i32_0 = arith.constant 0 : i32
    %c0_i32_1 = arith.constant 0 : i32
    return %c0_i32, %c0_i32_0 : i32, i32
  }
  func.func @transform_2(%arg0: i32) -> (i32, i32) {
    %c0_i32 = arith.constant 0 : i32
    %c0_i32_0 = arith.constant 0 : i32
    %c0_i32_1 = arith.constant 0 : i32
    return %c0_i32, %c0_i32_0 : i32, i32
  }
  func.func @transform_3(%arg0: i32) -> (i32, i32) {
    %c0_i32 = arith.constant 0 : i32
    %c0_i32_0 = arith.constant 0 : i32
    %c0_i32_1 = arith.constant 0 : i32
    return %c0_i32, %c0_i32_0 : i32, i32
  }
  func.func @transform_4(%arg0: i32) -> (i32, i32) {
    %c0_i32 = arith.constant 0 : i32
    %c0_i32_0 = arith.constant 0 : i32
    %c0_i32_1 = arith.constant 0 : i32
    return %c0_i32, %c0_i32_0 : i32, i32
  }
  func.func @transform_5(%arg0: i32) -> (i32, i32) {
    %c0_i32 = arith.constant 0 : i32
    %c0_i32_0 = arith.constant 0 : i32
    %c0_i32_1 = arith.constant 0 : i32
    return %c0_i32, %c0_i32_0 : i32, i32
  }
  func.func @transform_6(%arg0: i32) -> (i32, i32) {
    %c0_i32 = arith.constant 0 : i32
    %c0_i32_0 = arith.constant 0 : i32
    return %arg0, %c0_i32 : i32, i32
  }
}

</mosaic_0001>

<llo_original>
// kernel: tpu_custom_call.1
$region0: #{tpu_custom_call.1}
  #allocation0 [shape = 'u32[]', space=smem, size = 0x4, offset = 0x4, fixed_abs, tag = 'smem constant byte address 0x4 - core index']
  #allocation1 [shape = 'u32[144,128]{1,0:T(1,128)}', space=vmem, size = 0x12000, scoped, tag = 'internal scratch']
  %s0 = inlined_call_operand.hbm [shape: f32[8,256], index: 0, kind: input, shape index: {}]
  %s1 = inlined_call_operand.hbm [shape: f32[256,32], index: 1, kind: input, shape index: {}]
  %s2 = inlined_call_operand.hbm [shape: f32[32,256], index: 2, kind: input, shape index: {}]
  %s3 = inlined_call_operand.hbm [shape: f32[4,192], index: 3, kind: input, shape index: {}]
  %s4 = inlined_call_operand.hbm [shape: f32[4,64], index: 4, kind: input, shape index: {}]
  %s5 = inlined_call_operand.hbm [shape: f32[4,1], index: 5, kind: input, shape index: {}]
  %s6 = inlined_call_operand.hbm [shape: f32[8,256], index: 6, kind: output, shape index: {}]
  %s7 = sld [smem:[#allocation0]]
  $region58: #{tpu_custom_call.1} parent=0
    _
  %s9 = ssub.s32 1, %s7
  %s10 = scalar_select 0, %s9, %s7
  $region1: #{tpu_custom_call.1} parent=0
    #allocation2 [shape = 'u8[8192]{0}', space=vmem, size = 0x2000, scoped, tag = 'input window, operand 0, single buffered']
    #allocation3 [shape = 's32[1]{0}', space=sflag, size = 0x4, scoped, tag = 'scoped memory for tpu_custom_call.1']
    #allocation4 [shape = 's32[1]{0}', space=sflag, size = 0x4, scoped, tag = 'scoped memory for tpu_custom_call.1']
    #allocation5 [shape = 'u8[131072]{0}', space=vmem, size = 0x20000, scoped, tag = 'input window, operand 1, single buffered']
    #allocation6 [shape = 's32[1]{0}', space=sflag, size = 0x4, scoped, tag = 'scoped memory for tpu_custom_call.1']
    #allocation7 [shape = 'u8[32768]{0}', space=vmem, size = 0x8000, scoped, tag = 'input window, operand 2, single buffered']
    #allocation8 [shape = 'u8[4096]{0}', space=vmem, size = 0x1000, scoped, tag = 'input window, operand 3, single buffered']
    #allocation9 [shape = 's32[1]{0}', space=sflag, size = 0x4, scoped, tag = 'scoped memory for tpu_custom_call.1']
    #allocation10 [shape = 'u8[2048]{0}', space=vmem, size = 0x800, scoped, tag = 'input window, operand 4, single buffered']
    #allocation11 [shape = 'u8[2048]{0}', space=vmem, size = 0x800, scoped, tag = 'input window, operand 5, single buffered']
    #allocation12 [shape = 's32[1]{0}', space=sflag, size = 0x4, scoped, tag = 'scoped memory for tpu_custom_call.1']
    #allocation13 [shape = 'u8[8192]{0}', space=vmem, size = 0x2000, scoped, tag = 'output window, operand 0, single buffered']
    %11 = vsyncpa [#allocation3], 0
    %12 = vsyncpa [#allocation6], 0
    %13 = vsyncpa [#allocation9], 0
    %14 = vsyncpa [#allocation12], 0
    %15 = vsyncpa [#allocation4], 0
    // Predicated region
    $region2: #{tpu_custom_call.1} parent=1 // pred_check
      _
    $region3: #{tpu_custom_call.1} parent=1 // pred_check_branch
      %17 = sbr.rel (0) target = $region5
    $region4: #{tpu_custom_call.1} parent=1 // pred_region
      %s19 = ssub.s32 256, 256
      %20 = vsyncadd [#allocation3], %s19
      %s22 = sshll.u32 [#allocation2], 4
      %s23 = int_to_ptr.vmem [resolvable:$true] %s22
      %25 = dma.hbm_to_vmem [thread:$0]  %s0, 256, %s23, [#allocation3]
    $region5: #{tpu_custom_call.1} parent=1 // pred_fallthru
      _
    // Predicated region
    $region6: #{tpu_custom_call.1} parent=1 // pred_check
      _
    $region7: #{tpu_custom_call.1} parent=1 // pred_check_branch
      %27 = sbr.rel (0) target = $region9
    $region8: #{tpu_custom_call.1} parent=1 // pred_region
      %s29 = ssub.s32 4096, 4096
      %30 = vsyncadd [#allocation6], %s29
      %s31 = sshll.u32 [#allocation5], 4
      %s32 = int_to_ptr.vmem [resolvable:$true] %s31
      %37 = dma.hbm_to_vmem [thread:$0]  %s1, 4096, %s32, [#allocation6], 128, 128, 8
    $region9: #{tpu_custom_call.1} parent=1 // pred_fallthru
      _
    // Predicated region
    $region10: #{tpu_custom_call.1} parent=1 // pred_check
      _
    $region11: #{tpu_custom_call.1} parent=1 // pred_check_branch
      %39 = sbr.rel (0) target = $region13
    $region12: #{tpu_custom_call.1} parent=1 // pred_region
      %s41 = ssub.s32 1024, 1024
      %42 = vsyncadd [#allocation6], %s41
      %s43 = sshll.u32 [#allocation7], 4
      %s44 = int_to_ptr.vmem [resolvable:$true] %s43
      %49 = dma.hbm_to_vmem [thread:$0]  %s2, 1024, %s44, [#allocation6], 256, 256, 16
    $region13: #{tpu_custom_call.1} parent=1 // pred_fallthru
      _
    // Predicated region
    $region14: #{tpu_custom_call.1} parent=1 // pred_check
      _
    $region15: #{tpu_custom_call.1} parent=1 // pred_check_branch
      %51 = sbr.rel (0) target = $region17
    $region16: #{tpu_custom_call.1} parent=1 // pred_region
      %s53 = ssub.s32 128, 128
      %54 = vsyncadd [#allocation9], %s53
      %s56 = sshll.u32 [#allocation8], 4
      %s57 = int_to_ptr.vmem [resolvable:$true] %s56
      %59 = dma.hbm_to_vmem [thread:$0]  %s3, 128, %s57, [#allocation9]
    $region17: #{tpu_custom_call.1} parent=1 // pred_fallthru
      _
    // Predicated region
    $region18: #{tpu_custom_call.1} parent=1 // pred_check
      _
    $region19: #{tpu_custom_call.1} parent=1 // pred_check_branch
      %61 = sbr.rel (0) target = $region21
    $region20: #{tpu_custom_call.1} parent=1 // pred_region
      %s63 = ssub.s32 64, 64
      %64 = vsyncadd [#allocation9], %s63
      %s66 = sshll.u32 [#allocation10], 4
      %s67 = int_to_ptr.vmem [resolvable:$true] %s66
      %69 = dma.hbm_to_vmem [thread:$0]  %s4, 64, %s67, [#allocation9]
    $region21: #{tpu_custom_call.1} parent=1 // pred_fallthru
      _
    // Predicated region
    $region22: #{tpu_custom_call.1} parent=1 // pred_check
      _
    $region23: #{tpu_custom_call.1} parent=1 // pred_check_branch
      %71 = sbr.rel (0) target = $region25
    $region24: #{tpu_custom_call.1} parent=1 // pred_region
      %s73 = ssub.s32 64, 64
      %74 = vsyncadd [#allocation12], %s73
      %s76 = sshll.u32 [#allocation11], 4
      %s77 = int_to_ptr.vmem [resolvable:$true] %s76
      %79 = dma.hbm_to_vmem [thread:$0]  %s5, 64, %s77, [#allocation12]
    $region25: #{tpu_custom_call.1} parent=1 // pred_fallthru
      _
    // Predicated region
    $region26: #{tpu_custom_call.1} parent=1 // pred_check
      _
    $region27: #{tpu_custom_call.1} parent=1 // pred_check_branch
      %81 = sbr.rel (0) target = $region29
    $region28: #{tpu_custom_call.1} parent=1 // pred_region
      %82 = dma.done [#allocation3], 256
    $region29: #{tpu_custom_call.1} parent=1 // pred_fallthru
      _
    // Predicated region
    $region30: #{tpu_custom_call.1} parent=1 // pred_check
      _
    $region31: #{tpu_custom_call.1} parent=1 // pred_check_branch
      %84 = sbr.rel (0) target = $region33
    $region32: #{tpu_custom_call.1} parent=1 // pred_region
      %85 = dma.done [#allocation6], 4096
    $region33: #{tpu_custom_call.1} parent=1 // pred_fallthru
      _
    // Predicated region
    $region34: #{tpu_custom_call.1} parent=1 // pred_check
      _
    $region35: #{tpu_custom_call.1} parent=1 // pred_check_branch
      %87 = sbr.rel (0) target = $region37
    $region36: #{tpu_custom_call.1} parent=1 // pred_region
      %88 = dma.done [#allocation6], 1024
    $region37: #{tpu_custom_call.1} parent=1 // pred_fallthru
      _
    // Predicated region
    $region38: #{tpu_custom_call.1} parent=1 // pred_check
      _
    $region39: #{tpu_custom_call.1} parent=1 // pred_check_branch
      %90 = sbr.rel (0) target = $region41
    $region40: #{tpu_custom_call.1} parent=1 // pred_region
      %91 = dma.done [#allocation9], 128
    $region41: #{tpu_custom_call.1} parent=1 // pred_fallthru
      _
    // Predicated region
    $region42: #{tpu_custom_call.1} parent=1 // pred_check
      _
    $region43: #{tpu_custom_call.1} parent=1 // pred_check_branch
      %93 = sbr.rel (0) target = $region45
    $region44: #{tpu_custom_call.1} parent=1 // pred_region
      %94 = dma.done [#allocation9], 64
    $region45: #{tpu_custom_call.1} parent=1 // pred_fallthru
      _
    // Predicated region
    $region46: #{tpu_custom_call.1} parent=1 // pred_check
      _
    $region47: #{tpu_custom_call.1} parent=1 // pred_check_branch
      %96 = sbr.rel (0) target = $region49
    $region48: #{tpu_custom_call.1} parent=1 // pred_region
      %97 = dma.done [#allocation12], 64
    $region49: #{tpu_custom_call.1} parent=1 // pred_fallthru
      _
    %v98 = vld [vmem:[#allocation5] sm:$0xff]
    %v99 = vld [vmem:[#allocation5 + $0x8] sm:$0xff]
    %v100 = vld [vmem:[#allocation5 + $0x10] sm:$0xff]
    %v101 = vld [vmem:[#allocation5 + $0x18] sm:$0xff]
    %v102 = vld [vmem:[#allocation5 + $0x20] sm:$0xff]
    %v103 = vld [vmem:[#allocation5 + $0x28] sm:$0xff]
    %v104 = vld [vmem:[#allocation5 + $0x30] sm:$0xff]
    %v105 = vld [vmem:[#allocation5 + $0x38] sm:$0xff]
    %v106 = vld [vmem:[#allocation5 + $0x40] sm:$0xff]
    %v107 = vld [vmem:[#allocation5 + $0x48] sm:$0xff]
    %v108 = vld [vmem:[#allocation5 + $0x50] sm:$0xff]
    %v109 = vld [vmem:[#allocation5 + $0x58] sm:$0xff]
    %v110 = vld [vmem:[#allocation5 + $0x60] sm:$0xff]
    %v111 = vld [vmem:[#allocation5 + $0x68] sm:$0xff]
    %v112 = vld [vmem:[#allocation5 + $0x70] sm:$0xff]
    %v113 = vld [vmem:[#allocation5 + $0x78] sm:$0xff]
    %v114 = vld [vmem:[#allocation5 + $0x80] sm:$0xff]
    %v115 = vld [vmem:[#allocation5 + $0x88] sm:$0xff]
    %v116 = vld [vmem:[#allocation5 + $0x90] sm:$0xff]
    %v117 = vld [vmem:[#allocation5 + $0x98] sm:$0xff]
    %v118 = vld [vmem:[#allocation5 + $0xa0] sm:$0xff]
    %v119 = vld [vmem:[#allocation5 + $0xa8] sm:$0xff]
    %v120 = vld [vmem:[#allocation5 + $0xb0] sm:$0xff]
    %v121 = vld [vmem:[#allocation5 + $0xb8] sm:$0xff]
    %v122 = vld [vmem:[#allocation5 + $0xc0] sm:$0xff]
    %v123 = vld [vmem:[#allocation5 + $0xc8] sm:$0xff]
    %v124 = vld [vmem:[#allocation5 + $0xd0] sm:$0xff]
    %v125 = vld [vmem:[#allocation5 + $0xd8] sm:$0xff]
    %v126 = vld [vmem:[#allocation5 + $0xe0] sm:$0xff]
    %v127 = vld [vmem:[#allocation5 + $0xe8] sm:$0xff]
    %v128 = vld [vmem:[#allocation5 + $0xf0] sm:$0xff]
    %v129 = vld [vmem:[#allocation5 + $0xf8] sm:$0xff]
    %v130 = vld [vmem:[#allocation7] sm:$0xff]
    %v131 = vld [vmem:[#allocation7 + $0x8] sm:$0xff]
    %v132 = vld [vmem:[#allocation7 + $0x10] sm:$0xff]
    %v133 = vld [vmem:[#allocation7 + $0x18] sm:$0xff]
    %v134 = vld [vmem:[#allocation7 + $0x20] sm:$0xff]
    %v135 = vld [vmem:[#allocation7 + $0x28] sm:$0xff]
    %v136 = vld [vmem:[#allocation7 + $0x30] sm:$0xff]
    %v137 = vld [vmem:[#allocation7 + $0x38] sm:$0xff]
    %v138 = vld [vmem:[#allocation8] sm:$0xff]
    %v139 = vld [vmem:[#allocation10] sm:$0xf]
    %v140 = vld [vmem:[#allocation11] sm:$0xf]
    %v141 = vld [vmem:[#allocation2] sm:$0xff]
    %v142 = vld [vmem:[#allocation2 + $0x8] sm:$0xff]
    %143 = vmatprep.subr.mxu0 0.0
    %144 = vmatpush1.msra.mxu0 %v98
    %145 = vmatprep.subr.mxu0 0.0
    %146 = vmatpush1.msra.mxu0 %v99
    %147 = vmatprep.subr.mxu0 0.0
    %148 = vmatpush1.msra.mxu0 %v100
    %149 = vmatprep.subr.mxu0 0.0
    %150 = vmatpush1.msra.mxu0 %v101
    %151 = vmatprep.subr.mxu0 0.0
    %152 = vmatpush1.msra.mxu0 %v102
    %153 = vmatprep.subr.mxu0 0.0
    %154 = vmatpush1.msra.mxu0 %v103
    %155 = vmatprep.subr.mxu0 0.0
    %156 = vmatpush1.msra.mxu0 %v104
    %157 = vmatprep.subr.mxu0 0.0
    %158 = vmatpush1.msra.mxu0 %v105
    %159 = vmatprep.subr.mxu0 0.0
    %160 = vmatpush1.msra.mxu0 %v106
    %161 = vmatprep.subr.mxu0 0.0
    %162 = vmatpush1.msra.mxu0 %v107
    %163 = vmatprep.subr.mxu0 0.0
    %164 = vmatpush1.msra.mxu0 %v108
    %165 = vmatprep.subr.mxu0 0.0
    %166 = vmatpush1.msra.mxu0 %v109
    %167 = vmatprep.subr.mxu0 0.0
    %168 = vmatpush1.msra.mxu0 %v110
    %169 = vmatprep.subr.mxu0 0.0
    %170 = vmatpush1.msra.mxu0 %v111
    %171 = vmatprep.subr.mxu0 0.0
    %172 = vmatpush1.msra.mxu0 %v112
    %173 = vmatprep.subr.mxu0 0.0
    %174 = vmatpush1.msra.mxu0 %v113
    %175 = vmatprep.subr.mxu0 0.0
    %176 = vmatpush1.msra.mxu0 %v114
    %177 = vmatprep.subr.mxu0 0.0
    %178 = vmatpush1.msra.mxu0 %v115
    %179 = vmatprep.subr.mxu0 0.0
    %180 = vmatpush1.msra.mxu0 %v116
    %181 = vmatprep.subr.mxu0 0.0
    %182 = vmatpush1.msra.mxu0 %v117
    %183 = vmatprep.subr.mxu0 0.0
    %184 = vmatpush1.msra.mxu0 %v118
    %185 = vmatprep.subr.mxu0 0.0
    %186 = vmatpush1.msra.mxu0 %v119
    %187 = vmatprep.subr.mxu0 0.0
    %188 = vmatpush1.msra.mxu0 %v120
    %189 = vmatprep.subr.mxu0 0.0
    %190 = vmatpush1.msra.mxu0 %v121
    %191 = vmatprep.subr.mxu0 0.0
    %192 = vmatpush1.msra.mxu0 %v122
    %193 = vmatprep.subr.mxu0 0.0
    %194 = vmatpush1.msra.mxu0 %v123
    %195 = vmatprep.subr.mxu0 0.0
    %196 = vmatpush1.msra.mxu0 %v124
    %197 = vmatprep.subr.mxu0 0.0
    %198 = vmatpush1.msra.mxu0 %v125
    %199 = vmatprep.subr.mxu0 0.0
    %200 = vmatpush1.msra.mxu0 %v126
    %201 = vmatprep.subr.mxu0 0.0
    %202 = vmatpush1.msra.mxu0 %v127
    %203 = vmatprep.subr.mxu0 0.0
    %204 = vmatpush1.msra.mxu0 %v128
    %205 = vmatprep.subr.mxu0 0.0
    %206 = vmatpush1.msra.mxu0 %v129
    %207 = vmatprep.mubr.f32.mxu0 %v142
    %208 = vmatmul.mubr.f32.gmra.mrb[0].mxu0 %v141
    %v209 = vpop.f32.mrb[0].mxu0
    %v210 = vadd.f32 0.0, %v209
    %v211 = vpop.f32.mrb[0].mxu0
    %212 = vdwg.mxu0
    %v214 = vcombine.high %v138, %v138
    %216 = vxpose.xlu0.b32.start [1/16] %v138, 128
    %217 = vxpose.xlu0.b32.cont [2/16] 0.0, 128
    %218 = vxpose.xlu0.b32.cont [3/16] 0.0, 128
    %219 = vxpose.xlu0.b32.cont [4/16] 0.0, 128
    %220 = vxpose.xlu0.b32.cont [5/16] 0.0, 128
    %221 = vxpose.xlu0.b32.cont [6/16] 0.0, 128
    %222 = vxpose.xlu0.b32.cont [7/16] 0.0, 128
    %223 = vxpose.xlu0.b32.cont [8/16] 0.0, 128
    %224 = vxpose.xlu0.b32.cont [9/16] 0.0, 128
    %225 = vxpose.xlu0.b32.cont [10/16] 0.0, 128
    %226 = vxpose.xlu0.b32.cont [11/16] 0.0, 128
    %227 = vxpose.xlu0.b32.cont [12/16] 0.0, 128
    %228 = vxpose.xlu0.b32.cont [13/16] 0.0, 128
    %229 = vxpose.xlu0.b32.cont [14/16] 0.0, 128
    %230 = vxpose.xlu0.b32.cont [15/16] 0.0, 128
    %231 = vxpose.xlu0.b32.end [16/16] 0.0, 128
    %v232 = vpop.trf.xlu0
    %v233 = vpop.trf.xlu0
    %v234 = vpop.trf.xlu0
    %v235 = vpop.trf.xlu0
    %v236 = vpop.trf.xlu0
    %v237 = vpop.trf.xlu0
    %v238 = vpop.trf.xlu0
    %v239 = vpop.trf.xlu0
    %v240 = vpop.trf.xlu0
    %v241 = vpop.trf.xlu0
    %v242 = vpop.trf.xlu0
    %v243 = vpop.trf.xlu0
    %v244 = vpop.trf.xlu0
    %v245 = vpop.trf.xlu0
    %v246 = vpop.trf.xlu0
    %v247 = vpop.trf.xlu0
    %248 = vxpose.xlu0.b32.start [1/16] %v214, 128
    %249 = vxpose.xlu0.b32.cont [2/16] 0.0, 128
    %250 = vxpose.xlu0.b32.cont [3/16] 0.0, 128
    %251 = vxpose.xlu0.b32.cont [4/16] 0.0, 128
    %252 = vxpose.xlu0.b32.cont [5/16] 0.0, 128
    %253 = vxpose.xlu0.b32.cont [6/16] 0.0, 128
    %254 = vxpose.xlu0.b32.cont [7/16] 0.0, 128
    %255 = vxpose.xlu0.b32.cont [8/16] 0.0, 128
    %256 = vxpose.xlu0.b32.cont [9/16] 0.0, 128
    %257 = vxpose.xlu0.b32.cont [10/16] 0.0, 128
    %258 = vxpose.xlu0.b32.cont [11/16] 0.0, 128
    %259 = vxpose.xlu0.b32.cont [12/16] 0.0, 128
    %260 = vxpose.xlu0.b32.cont [13/16] 0.0, 128
    %261 = vxpose.xlu0.b32.cont [14/16] 0.0, 128
    %262 = vxpose.xlu0.b32.cont [15/16] 0.0, 128
    %263 = vxpose.xlu0.b32.end [16/16] 0.0, 128
    %v264 = vpop.trf.xlu0
    %v265 = vpop.trf.xlu0
    %v266 = vpop.trf.xlu0
    %v267 = vpop.trf.xlu0
    %v268 = vpop.trf.xlu0
    %v269 = vpop.trf.xlu0
    %v270 = vpop.trf.xlu0
    %v271 = vpop.trf.xlu0
    %v272 = vpop.trf.xlu0
    %v273 = vpop.trf.xlu0
    %v274 = vpop.trf.xlu0
    %v275 = vpop.trf.xlu0
    %v276 = vpop.trf.xlu0
    %v277 = vpop.trf.xlu0
    %v278 = vpop.trf.xlu0
    %v279 = vpop.trf.xlu0
    %vm280 = vcmask 31744
    %v282 = vsel %vm280, %v232, 0
    %v285 = vsel %vm280, %v233, 0
    %v288 = vsel %vm280, %v234, 0
    %v291 = vsel %vm280, %v235, 0
    %v294 = vsel %vm280, %v236, 0
    %v297 = vsel %vm280, %v237, 0
    %v300 = vsel %vm280, %v238, 0
    %v303 = vsel %vm280, %v239, 0
    %v306 = vsel %vm280, %v240, 0
    %v309 = vsel %vm280, %v241, 0
    %v312 = vsel %vm280, %v242, 0
    %v315 = vsel %vm280, %v243, 0
    %v318 = vsel %vm280, %v244, 0
    %v321 = vsel %vm280, %v245, 0
    %v324 = vsel %vm280, %v246, 0
    %v327 = vsel %vm280, %v247, 0
    %v330 = vsel %vm280, %v264, 0
    %v333 = vsel %vm280, %v265, 0
    %v336 = vsel %vm280, %v266, 0
    %v339 = vsel %vm280, %v267, 0
    %v342 = vsel %vm280, %v268, 0
    %v345 = vsel %vm280, %v269, 0
    %v348 = vsel %vm280, %v270, 0
    %v351 = vsel %vm280, %v271, 0
    %vm353 = vcmask 1043456
    %v355 = vsel %vm353, %v210, 0
    %357 = vmatprep.subr.mxu0 0.0
    %358 = vmatpush1.msra.mxu0 %v355
    %359 = vmatprep.subr.mxu0 0.0
    %360 = vmatpush1.msra.mxu0 0.0
    %361 = vmatprep.subr.mxu0 0.0
    %362 = vmatpush1.msra.mxu0 0.0
    %363 = vmatprep.subr.mxu0 0.0
    %364 = vmatpush1.msra.mxu0 0.0
    %365 = vmatprep.subr.mxu0 0.0
    %366 = vmatpush1.msra.mxu0 0.0
    %367 = vmatprep.subr.mxu0 0.0
    %368 = vmatpush1.msra.mxu0 0.0
    %369 = vmatprep.subr.mxu0 0.0
    %370 = vmatpush1.msra.mxu0 0.0
    %371 = vmatprep.subr.mxu0 0.0
    %372 = vmatpush1.msra.mxu0 0.0
    %373 = vmatprep.subr.mxu0 0.0
    %374 = vmatpush1.msra.mxu0 0.0
    %375 = vmatprep.subr.mxu0 0.0
    %376 = vmatpush1.msra.mxu0 0.0
    %377 = vmatprep.subr.mxu0 0.0
    %378 = vmatpush1.msra.mxu0 0.0
    %379 = vmatprep.subr.mxu0 0.0
    %380 = vmatpush1.msra.mxu0 0.0
    %381 = vmatprep.subr.mxu0 0.0
    %382 = vmatpush1.msra.mxu0 0.0
    %383 = vmatprep.subr.mxu0 0.0
    %384 = vmatpush1.msra.mxu0 0.0
    %385 = vmatprep.subr.mxu0 0.0
    %386 = vmatpush1.msra.mxu0 0.0
    %387 = vmatprep.subr.mxu0 0.0
    %388 = vmatpush1.msra.mxu0 0.0
    %389 = vmatprep.subr.mxu0 0.0
    %390 = vmatpush1.msra.mxu0 0.0
    %391 = vmatprep.subr.mxu0 0.0
    %392 = vmatpush1.msra.mxu0 0.0
    %393 = vmatprep.subr.mxu0 0.0
    %394 = vmatpush1.msra.mxu0 0.0
    %395 = vmatprep.subr.mxu0 0.0
    %396 = vmatpush1.msra.mxu0 0.0
    %397 = vmatprep.subr.mxu0 0.0
    %398 = vmatpush1.msra.mxu0 0.0
    %399 = vmatprep.subr.mxu0 0.0
    %400 = vmatpush1.msra.mxu0 0.0
    %401 = vmatprep.subr.mxu0 0.0
    %402 = vmatpush1.msra.mxu0 0.0
    %403 = vmatprep.subr.mxu0 0.0
    %404 = vmatpush1.msra.mxu0 0.0
    %405 = vmatprep.subr.mxu0 0.0
    %406 = vmatpush1.msra.mxu0 0.0
    %407 = vmatprep.subr.mxu0 0.0
    %408 = vmatpush1.msra.mxu0 0.0
    %409 = vmatprep.subr.mxu0 0.0
    %410 = vmatpush1.msra.mxu0 0.0
    %411 = vmatprep.subr.mxu0 0.0
    %412 = vmatpush1.msra.mxu0 0.0
    %413 = vmatprep.subr.mxu0 0.0
    %414 = vmatpush1.msra.mxu0 0.0
    %415 = vmatprep.subr.mxu0 0.0
    %416 = vmatpush1.msra.mxu0 0.0
    %417 = vmatprep.subr.mxu0 0.0
    %418 = vmatpush1.msra.mxu0 0.0
    %419 = vmatprep.subr.mxu0 0.0
    %420 = vmatpush1.msra.mxu0 0.0
    %421 = vmatprep.mubr.f32.mxu0 0.0
    %422 = vmatmul.mubr.f32.gmra.mrb[0].mxu0 %v282
    %v423 = vpop.f32.mrb[0].mxu0
    %v424 = vadd.f32 0.0, %v423
    %v425 = vpop.f32.mrb[0].mxu0
    %426 = vmatprep.mubr.f32.mxu0 0.0
    %427 = vmatmul.mubr.f32.gmra.mrb[0].mxu0 %v285
    %v428 = vpop.f32.mrb[0].mxu0
    %v429 = vadd.f32 0.0, %v428
    %v430 = vpop.f32.mrb[0].mxu0
    %431 = vmatprep.mubr.f32.mxu0 0.0
    %432 = vmatmul.mubr.f32.gmra.mrb[0].mxu0 %v288
    %v433 = vpop.f32.mrb[0].mxu0
    %v434 = vadd.f32 0.0, %v433
    %v435 = vpop.f32.mrb[0].mxu0
    %436 = vmatprep.mubr.f32.mxu0 0.0
    %437 = vmatmul.mubr.f32.gmra.mrb[0].mxu0 %v291
    %v438 = vpop.f32.mrb[0].mxu0
    %v439 = vadd.f32 0.0, %v438
    %v440 = vpop.f32.mrb[0].mxu0
    %441 = vmatprep.mubr.f32.mxu0 0.0
    %442 = vmatmul.mubr.f32.gmra.mrb[0].mxu0 %v294
    %v443 = vpop.f32.mrb[0].mxu0
    %v444 = vadd.f32 0.0, %v443
    %v445 = vpop.f32.mrb[0].mxu0
    %446 = vmatprep.mubr.f32.mxu0 0.0
    %447 = vmatmul.mubr.f32.gmra.mrb[0].mxu0 %v297
    %v448 = vpop.f32.mrb[0].mxu0
    %v449 = vadd.f32 0.0, %v448
    %v450 = vpop.f32.mrb[0].mxu0
    %451 = vmatprep.mubr.f32.mxu0 0.0
    %452 = vmatmul.mubr.f32.gmra.mrb[0].mxu0 %v300
    %v453 = vpop.f32.mrb[0].mxu0
    %v454 = vadd.f32 0.0, %v453
    %v455 = vpop.f32.mrb[0].mxu0
    %456 = vmatprep.mubr.f32.mxu0 0.0
    %457 = vmatmul.mubr.f32.gmra.mrb[0].mxu0 %v303
    %v458 = vpop.f32.mrb[0].mxu0
    %v459 = vadd.f32 0.0, %v458
    %v460 = vpop.f32.mrb[0].mxu0
    %461 = vmatprep.mubr.f32.mxu0 0.0
    %462 = vmatmul.mubr.f32.gmra.mrb[0].mxu0 %v306
    %v463 = vpop.f32.mrb[0].mxu0
    %v464 = vadd.f32 0.0, %v463
    %v465 = vpop.f32.mrb[0].mxu0
    %466 = vmatprep.mubr.f32.mxu0 0.0
    %467 = vmatmul.mubr.f32.gmra.mrb[0].mxu0 %v309
    %v468 = vpop.f32.mrb[0].mxu0
    %v469 = vadd.f32 0.0, %v468
    %v470 = vpop.f32.mrb[0].mxu0
    %471 = vmatprep.mubr.f32.mxu0 0.0
    %472 = vmatmul.mubr.f32.gmra.mrb[0].mxu0 %v312
    %v473 = vpop.f32.mrb[0].mxu0
    %v474 = vadd.f32 0.0, %v473
    %v475 = vpop.f32.mrb[0].mxu0
    %476 = vmatprep.mubr.f32.mxu0 0.0
    %477 = vmatmul.mubr.f32.gmra.mrb[0].mxu0 %v315
    %v478 = vpop.f32.mrb[0].mxu0
    %v479 = vadd.f32 0.0, %v478
    %v480 = vpop.f32.mrb[0].mxu0
    %481 = vmatprep.mubr.f32.mxu0 0.0
    %482 = vmatmul.mubr.f32.gmra.mrb[0].mxu0 %v318
    %v483 = vpop.f32.mrb[0].mxu0
    %v484 = vadd.f32 0.0, %v483
    %v485 = vpop.f32.mrb[0].mxu0
    %486 = vmatprep.mubr.f32.mxu0 0.0
    %487 = vmatmul.mubr.f32.gmra.mrb[0].mxu0 %v321
    %v488 = vpop.f32.mrb[0].mxu0
    %v489 = vadd.f32 0.0, %v488
    %v490 = vpop.f32.mrb[0].mxu0
    %491 = vmatprep.mubr.f32.mxu0 0.0
    %492 = vmatmul.mubr.f32.gmra.mrb[0].mxu0 %v324
    %v493 = vpop.f32.mrb[0].mxu0
    %v494 = vadd.f32 0.0, %v493
    %v495 = vpop.f32.mrb[0].mxu0
    %496 = vmatprep.mubr.f32.mxu0 0.0
    %497 = vmatmul.mubr.f32.gmra.mrb[0].mxu0 %v327
    %v498 = vpop.f32.mrb[0].mxu0
    %v499 = vadd.f32 0.0, %v498
    %v500 = vpop.f32.mrb[0].mxu0
    %501 = vmatprep.mubr.f32.mxu0 0.0
    %502 = vmatmul.mubr.f32.gmra.mrb[0].mxu0 %v330
    %v503 = vpop.f32.mrb[0].mxu0
    %v504 = vadd.f32 0.0, %v503
    %v505 = vpop.f32.mrb[0].mxu0
    %506 = vmatprep.mubr.f32.mxu0 0.0
    %507 = vmatmul.mubr.f32.gmra.mrb[0].mxu0 %v333
    %v508 = vpop.f32.mrb[0].mxu0
    %v509 = vadd.f32 0.0, %v508
    %v510 = vpop.f32.mrb[0].mxu0
    %511 = vmatprep.mubr.f32.mxu0 0.0
    %512 = vmatmul.mubr.f32.gmra.mrb[0].mxu0 %v336
    %v513 = vpop.f32.mrb[0].mxu0
    %v514 = vadd.f32 0.0, %v513
    %v515 = vpop.f32.mrb[0].mxu0
    %516 = vmatprep.mubr.f32.mxu0 0.0
    %517 = vmatmul.mubr.f32.gmra.mrb[0].mxu0 %v339
    %v518 = vpop.f32.mrb[0].mxu0
    %v519 = vadd.f32 0.0, %v518
    %v520 = vpop.f32.mrb[0].mxu0
    %521 = vmatprep.mubr.f32.mxu0 0.0
    %522 = vmatmul.mubr.f32.gmra.mrb[0].mxu0 %v342
    %v523 = vpop.f32.mrb[0].mxu0
    %v524 = vadd.f32 0.0, %v523
    %v525 = vpop.f32.mrb[0].mxu0
    %526 = vmatprep.mubr.f32.mxu0 0.0
    %527 = vmatmul.mubr.f32.gmra.mrb[0].mxu0 %v345
    %v528 = vpop.f32.mrb[0].mxu0
    %v529 = vadd.f32 0.0, %v528
    %v530 = vpop.f32.mrb[0].mxu0
    %531 = vmatprep.mubr.f32.mxu0 0.0
    %532 = vmatmul.mubr.f32.gmra.mrb[0].mxu0 %v348
    %v533 = vpop.f32.mrb[0].mxu0
    %v534 = vadd.f32 0.0, %v533
    %v535 = vpop.f32.mrb[0].mxu0
    %536 = vmatprep.mubr.f32.mxu0 0.0
    %537 = vmatmul.mubr.f32.gmra.mrb[0].mxu0 %v351
    %v538 = vpop.f32.mrb[0].mxu0
    %v539 = vadd.f32 0.0, %v538
    %v540 = vpop.f32.mrb[0].mxu0
    %541 = vdwg.mxu0
    %542 = vxpose.xlu0.b32.start [1/16] %v424, 128
    %543 = vxpose.xlu0.b32.cont [2/16] %v429, 128
    %544 = vxpose.xlu0.b32.cont [3/16] %v434, 128
    %545 = vxpose.xlu0.b32.cont [4/16] %v439, 128
    %546 = vxpose.xlu0.b32.cont [5/16] 0.0, 128
    %547 = vxpose.xlu0.b32.cont [6/16] 0.0, 128
    %548 = vxpose.xlu0.b32.cont [7/16] 0.0, 128
    %549 = vxpose.xlu0.b32.cont [8/16] 0.0, 128
    %550 = vxpose.xlu0.b32.cont [9/16] 0.0, 128
    %551 = vxpose.xlu0.b32.cont [10/16] 0.0, 128
    %552 = vxpose.xlu0.b32.cont [11/16] 0.0, 128
    %553 = vxpose.xlu0.b32.cont [12/16] 0.0, 128
    %554 = vxpose.xlu0.b32.cont [13/16] 0.0, 128
    %555 = vxpose.xlu0.b32.cont [14/16] 0.0, 128
    %556 = vxpose.xlu0.b32.cont [15/16] 0.0, 128
    %557 = vxpose.xlu0.b32.end [16/16] 0.0, 128
    %v558 = vpop.trf.xlu0
    %v559 = vpop.trf.xlu0
    %v560 = vpop.trf.xlu0
    %v561 = vpop.trf.xlu0
    %v562 = vpop.trf.xlu0
    %v563 = vpop.trf.xlu0
    %v564 = vpop.trf.xlu0
    %v565 = vpop.trf.xlu0
    %v566 = vpop.trf.xlu0
    %v567 = vpop.trf.xlu0
    %v568 = vpop.trf.xlu0
    %v569 = vpop.trf.xlu0
    %v570 = vpop.trf.xlu0
    %v571 = vpop.trf.xlu0
    %v572 = vpop.trf.xlu0
    %v573 = vpop.trf.xlu0
    %vm574 = vcmask 261120
    %v576 = vsel %vm574, %v558, 0
    %v579 = vsel %vm574, %v559, 0
    %v582 = vsel %vm574, %v560, 0
    %v585 = vsel %vm574, %v561, 0
    %587 = vmatprep.subr.mxu0 0.0
    %588 = vmatpush1.msra.mxu0 %v464
    %589 = vmatprep.subr.mxu0 0.0
    %590 = vmatpush1.msra.mxu0 %v469
    %591 = vmatprep.subr.mxu0 0.0
    %592 = vmatpush1.msra.mxu0 %v474
    %593 = vmatprep.subr.mxu0 0.0
    %594 = vmatpush1.msra.mxu0 %v479
    %595 = vmatprep.subr.mxu0 0.0
    %596 = vmatpush1.msra.mxu0 0.0
    %597 = vmatprep.subr.mxu0 0.0
    %598 = vmatpush1.msra.mxu0 0.0
    %599 = vmatprep.subr.mxu0 0.0
    %600 = vmatpush1.msra.mxu0 0.0
    %601 = vmatprep.subr.mxu0 0.0
    %602 = vmatpush1.msra.mxu0 0.0
    %603 = vmatprep.subr.mxu0 0.0
    %604 = vmatpush1.msra.mxu0 0.0
    %605 = vmatprep.subr.mxu0 0.0
    %606 = vmatpush1.msra.mxu0 0.0
    %607 = vmatprep.subr.mxu0 0.0
    %608 = vmatpush1.msra.mxu0 0.0
    %609 = vmatprep.subr.mxu0 0.0
    %610 = vmatpush1.msra.mxu0 0.0
    %611 = vmatprep.subr.mxu0 0.0
    %612 = vmatpush1.msra.mxu0 0.0
    %613 = vmatprep.subr.mxu0 0.0
    %614 = vmatpush1.msra.mxu0 0.0
    %615 = vmatprep.subr.mxu0 0.0
    %616 = vmatpush1.msra.mxu0 0.0
    %617 = vmatprep.subr.mxu0 0.0
    %618 = vmatpush1.msra.mxu0 0.0
    %619 = vmatprep.subr.mxu0 0.0
    %620 = vmatpush1.msra.mxu0 0.0
    %621 = vmatprep.subr.mxu0 0.0
    %622 = vmatpush1.msra.mxu0 0.0
    %623 = vmatprep.subr.mxu0 0.0
    %624 = vmatpush1.msra.mxu0 0.0
    %625 = vmatprep.subr.mxu0 0.0
    %626 = vmatpush1.msra.mxu0 0.0
    %627 = vmatprep.subr.mxu0 0.0
    %628 = vmatpush1.msra.mxu0 0.0
    %629 = vmatprep.subr.mxu0 0.0
    %630 = vmatpush1.msra.mxu0 0.0
    %631 = vmatprep.subr.mxu0 0.0
    %632 = vmatpush1.msra.mxu0 0.0
    %633 = vmatprep.subr.mxu0 0.0
    %634 = vmatpush1.msra.mxu0 0.0
    %635 = vmatprep.subr.mxu0 0.0
    %636 = vmatpush1.msra.mxu0 0.0
    %637 = vmatprep.subr.mxu0 0.0
    %638 = vmatpush1.msra.mxu0 0.0
    %639 = vmatprep.subr.mxu0 0.0
    %640 = vmatpush1.msra.mxu0 0.0
    %641 = vmatprep.subr.mxu0 0.0
    %642 = vmatpush1.msra.mxu0 0.0
    %643 = vmatprep.subr.mxu0 0.0
    %644 = vmatpush1.msra.mxu0 0.0
    %645 = vmatprep.subr.mxu0 0.0
    %646 = vmatpush1.msra.mxu0 0.0
    %647 = vmatprep.subr.mxu0 0.0
    %648 = vmatpush1.msra.mxu0 0.0
    %649 = vmatprep.subr.mxu0 0.0
    %650 = vmatpush1.msra.mxu0 0.0
    %651 = vmatprep.mubr.f32.mxu0 0.0
    %652 = vmatmul.mubr.f32.gmra.mrb[0].mxu0 %v576
    %v653 = vpop.f32.mrb[0].mxu0
    %v654 = vadd.f32 0.0, %v653
    %v655 = vpop.f32.mrb[0].mxu0
    %656 = vmatprep.mubr.f32.mxu0 0.0
    %657 = vmatmul.mubr.f32.gmra.mrb[0].mxu0 %v579
    %v658 = vpop.f32.mrb[0].mxu0
    %v659 = vadd.f32 0.0, %v658
    %v660 = vpop.f32.mrb[0].mxu0
    %661 = vmatprep.mubr.f32.mxu0 0.0
    %662 = vmatmul.mubr.f32.gmra.mrb[0].mxu0 %v582
    %v663 = vpop.f32.mrb[0].mxu0
    %v664 = vadd.f32 0.0, %v663
    %v665 = vpop.f32.mrb[0].mxu0
    %666 = vmatprep.mubr.f32.mxu0 0.0
    %667 = vmatmul.mubr.f32.gmra.mrb[0].mxu0 %v585
    %v668 = vpop.f32.mrb[0].mxu0
    %v669 = vadd.f32 0.0, %v668
    %v670 = vpop.f32.mrb[0].mxu0
    %671 = vdwg.mxu0
    %672 = vxpose.xlu0.b32.start [1/16] %v444, 128
    %673 = vxpose.xlu0.b32.cont [2/16] %v449, 128
    %674 = vxpose.xlu0.b32.cont [3/16] %v454, 128
    %675 = vxpose.xlu0.b32.cont [4/16] %v459, 128
    %676 = vxpose.xlu0.b32.cont [5/16] 0.0, 128
    %677 = vxpose.xlu0.b32.cont [6/16] 0.0, 128
    %678 = vxpose.xlu0.b32.cont [7/16] 0.0, 128
    %679 = vxpose.xlu0.b32.cont [8/16] 0.0, 128
    %680 = vxpose.xlu0.b32.cont [9/16] 0.0, 128
    %681 = vxpose.xlu0.b32.cont [10/16] 0.0, 128
    %682 = vxpose.xlu0.b32.cont [11/16] 0.0, 128
    %683 = vxpose.xlu0.b32.cont [12/16] 0.0, 128
    %684 = vxpose.xlu0.b32.cont [13/16] 0.0, 128
    %685 = vxpose.xlu0.b32.cont [14/16] 0.0, 128
    %686 = vxpose.xlu0.b32.cont [15/16] 0.0, 128
    %687 = vxpose.xlu0.b32.end [16/16] 0.0, 128
    %v688 = vpop.trf.xlu0
    %v689 = vpop.trf.xlu0
    %v690 = vpop.trf.xlu0
    %v691 = vpop.trf.xlu0
    %v692 = vpop.trf.xlu0
    %v693 = vpop.trf.xlu0
    %v694 = vpop.trf.xlu0
    %v695 = vpop.trf.xlu0
    %v696 = vpop.trf.xlu0
    %v697 = vpop.trf.xlu0
    %v698 = vpop.trf.xlu0
    %v699 = vpop.trf.xlu0
    %v700 = vpop.trf.xlu0
    %v701 = vpop.trf.xlu0
    %v702 = vpop.trf.xlu0
    %v703 = vpop.trf.xlu0
    %v705 = vsel %vm574, %v688, 0
    %v708 = vsel %vm574, %v689, 0
    %v711 = vsel %vm574, %v690, 0
    %v714 = vsel %vm574, %v691, 0
    %716 = vmatprep.subr.mxu0 0.0
    %717 = vmatpush1.msra.mxu0 %v484
    %718 = vmatprep.subr.mxu0 0.0
    %719 = vmatpush1.msra.mxu0 %v489
    %720 = vmatprep.subr.mxu0 0.0
    %721 = vmatpush1.msra.mxu0 %v494
    %722 = vmatprep.subr.mxu0 0.0
    %723 = vmatpush1.msra.mxu0 %v499
    %724 = vmatprep.subr.mxu0 0.0
    %725 = vmatpush1.msra.mxu0 0.0
    %726 = vmatprep.subr.mxu0 0.0
    %727 = vmatpush1.msra.mxu0 0.0
    %728 = vmatprep.subr.mxu0 0.0
    %729 = vmatpush1.msra.mxu0 0.0
    %730 = vmatprep.subr.mxu0 0.0
    %731 = vmatpush1.msra.mxu0 0.0
    %732 = vmatprep.subr.mxu0 0.0
    %733 = vmatpush1.msra.mxu0 0.0
    %734 = vmatprep.subr.mxu0 0.0
    %735 = vmatpush1.msra.mxu0 0.0
    %736 = vmatprep.subr.mxu0 0.0
    %737 = vmatpush1.msra.mxu0 0.0
    %738 = vmatprep.subr.mxu0 0.0
    %739 = vmatpush1.msra.mxu0 0.0
    %740 = vmatprep.subr.mxu0 0.0
    %741 = vmatpush1.msra.mxu0 0.0
    %742 = vmatprep.subr.mxu0 0.0
    %743 = vmatpush1.msra.mxu0 0.0
    %744 = vmatprep.subr.mxu0 0.0
    %745 = vmatpush1.msra.mxu0 0.0
    %746 = vmatprep.subr.mxu0 0.0
    %747 = vmatpush1.msra.mxu0 0.0
    %748 = vmatprep.subr.mxu0 0.0
    %749 = vmatpush1.msra.mxu0 0.0
    %750 = vmatprep.subr.mxu0 0.0
    %751 = vmatpush1.msra.mxu0 0.0
    %752 = vmatprep.subr.mxu0 0.0
    %753 = vmatpush1.msra.mxu0 0.0
    %754 = vmatprep.subr.mxu0 0.0
    %755 = vmatpush1.msra.mxu0 0.0
    %756 = vmatprep.subr.mxu0 0.0
    %757 = vmatpush1.msra.mxu0 0.0
    %758 = vmatprep.subr.mxu0 0.0
    %759 = vmatpush1.msra.mxu0 0.0
    %760 = vmatprep.subr.mxu0 0.0
    %761 = vmatpush1.msra.mxu0 0.0
    %762 = vmatprep.subr.mxu0 0.0
    %763 = vmatpush1.msra.mxu0 0.0
    %764 = vmatprep.subr.mxu0 0.0
    %765 = vmatpush1.msra.mxu0 0.0
    %766 = vmatprep.subr.mxu0 0.0
    %767 = vmatpush1.msra.mxu0 0.0
    %768 = vmatprep.subr.mxu0 0.0
    %769 = vmatpush1.msra.mxu0 0.0
    %770 = vmatprep.subr.mxu0 0.0
    %771 = vmatpush1.msra.mxu0 0.0
    %772 = vmatprep.subr.mxu0 0.0
    %773 = vmatpush1.msra.mxu0 0.0
    %774 = vmatprep.subr.mxu0 0.0
    %775 = vmatpush1.msra.mxu0 0.0
    %776 = vmatprep.subr.mxu0 0.0
    %777 = vmatpush1.msra.mxu0 0.0
    %778 = vmatprep.subr.mxu0 0.0
    %779 = vmatpush1.msra.mxu0 0.0
    %780 = vmatprep.mubr.f32.mxu0 0.0
    %781 = vmatmul.mubr.f32.gmra.mrb[0].mxu0 %v705
    %v782 = vpop.f32.mrb[0].mxu0
    %v783 = vadd.f32 0.0, %v782
    %v784 = vpop.f32.mrb[0].mxu0
    %785 = vmatprep.mubr.f32.mxu0 0.0
    %786 = vmatmul.mubr.f32.gmra.mrb[0].mxu0 %v708
    %v787 = vpop.f32.mrb[0].mxu0
    %v788 = vadd.f32 0.0, %v787
    %v789 = vpop.f32.mrb[0].mxu0
    %790 = vmatprep.mubr.f32.mxu0 0.0
    %791 = vmatmul.mubr.f32.gmra.mrb[0].mxu0 %v711
    %v792 = vpop.f32.mrb[0].mxu0
    %v793 = vadd.f32 0.0, %v792
    %v794 = vpop.f32.mrb[0].mxu0
    %795 = vmatprep.mubr.f32.mxu0 0.0
    %796 = vmatmul.mubr.f32.gmra.mrb[0].mxu0 %v714
    %v797 = vpop.f32.mrb[0].mxu0
    %v798 = vadd.f32 0.0, %v797
    %v799 = vpop.f32.mrb[0].mxu0
    %800 = vdwg.mxu0
    %v801 = vsel %vm574, %v654, -inf
    %802 = vmax.xlane.f32.xlu0 %v801
    %v803 = vpop.xlane.xlu0 %802
    %v804 = vsel %vm574, %v659, -inf
    %805 = vmax.xlane.f32.xlu0 %v804
    %v806 = vpop.xlane.xlu0 %805
    %v807 = vsel %vm574, %v664, -inf
    %808 = vmax.xlane.f32.xlu0 %v807
    %v809 = vpop.xlane.xlu0 %808
    %v810 = vsel %vm574, %v669, -inf
    %811 = vmax.xlane.f32.xlu0 %v810
    %v812 = vpop.xlane.xlu0 %811
    %v813 = vsel %vm574, %v783, -inf
    %814 = vmax.xlane.f32.xlu0 %v813
    %v815 = vpop.xlane.xlu0 %814
    %v816 = vsel %vm574, %v788, -inf
    %817 = vmax.xlane.f32.xlu0 %v816
    %v818 = vpop.xlane.xlu0 %817
    %v819 = vsel %vm574, %v793, -inf
    %820 = vmax.xlane.f32.xlu0 %v819
    %v821 = vpop.xlane.xlu0 %820
    %v822 = vsel %vm574, %v798, -inf
    %823 = vmax.xlane.f32.xlu0 %v822
    %v824 = vpop.xlane.xlu0 %823
    %v825 = vsub.f32 %v654, %v803
    %v826 = vsub.f32 %v659, %v806
    %v827 = vsub.f32 %v664, %v809
    %v828 = vsub.f32 %v669, %v812
    %v829 = vsub.f32 %v783, %v815
    %v830 = vsub.f32 %v788, %v818
    %v831 = vsub.f32 %v793, %v821
    %v832 = vsub.f32 %v798, %v824
    %v833 = vmul.f32 %v825, 1.442695
    %v834 = vpow.pop %v833
    %v835 = vmul.f32 %v826, 1.442695
    %v836 = vpow.pop %v835
    %v837 = vmul.f32 %v827, 1.442695
    %v838 = vpow.pop %v837
    %v839 = vmul.f32 %v828, 1.442695
    %v840 = vpow.pop %v839
    %v841 = vmul.f32 %v829, 1.442695
    %v842 = vpow.pop %v841
    %v843 = vmul.f32 %v830, 1.442695
    %v844 = vpow.pop %v843
    %v845 = vmul.f32 %v831, 1.442695
    %v846 = vpow.pop %v845
    %v847 = vmul.f32 %v832, 1.442695
    %v848 = vpow.pop %v847
    %v849 = vsel %vm574, %v834, 0.0
    %850 = vadd.xlane.f32.xlu0 %v849
    %v851 = vpop.xlane.xlu0 %850
    %v852 = vsel %vm574, %v836, 0.0
    %853 = vadd.xlane.f32.xlu0 %v852
    %v854 = vpop.xlane.xlu0 %853
    %v855 = vsel %vm574, %v838, 0.0
    %856 = vadd.xlane.f32.xlu0 %v855
    %v857 = vpop.xlane.xlu0 %856
    %v858 = vsel %vm574, %v840, 0.0
    %859 = vadd.xlane.f32.xlu0 %v858
    %v860 = vpop.xlane.xlu0 %859
    %v861 = vsel %vm574, %v842, 0.0
    %862 = vadd.xlane.f32.xlu0 %v861
    %v863 = vpop.xlane.xlu0 %862
    %v864 = vsel %vm574, %v844, 0.0
    %865 = vadd.xlane.f32.xlu0 %v864
    %v866 = vpop.xlane.xlu0 %865
    %v867 = vsel %vm574, %v846, 0.0
    %868 = vadd.xlane.f32.xlu0 %v867
    %v869 = vpop.xlane.xlu0 %868
    %v870 = vsel %vm574, %v848, 0.0
    %871 = vadd.xlane.f32.xlu0 %v870
    %v872 = vpop.xlane.xlu0 %871
    %v873 = vrcp.pop %v851
    %v874 = vrcp.pop %v854
    %v875 = vrcp.pop %v857
    %v876 = vrcp.pop %v860
    %v877 = vrcp.pop %v863
    %v878 = vrcp.pop %v866
    %v879 = vrcp.pop %v869
    %v880 = vrcp.pop %v872
    %v881 = vmul.f32 %v834, %v873
    %v882 = vmul.f32 %v836, %v874
    %v883 = vmul.f32 %v838, %v875
    %v884 = vmul.f32 %v840, %v876
    %v885 = vmul.f32 %v842, %v877
    %v886 = vmul.f32 %v844, %v878
    %v887 = vmul.f32 %v846, %v879
    %v888 = vmul.f32 %v848, %v880
    %v890 = vsel %vm574, %v504, 0
    %v893 = vsel %vm574, %v509, 0
    %v896 = vsel %vm574, %v514, 0
    %v899 = vsel %vm574, %v519, 0
    %v902 = vsel %vm574, %v881, 0
    %v905 = vsel %vm574, %v882, 0
    %v908 = vsel %vm574, %v883, 0
    %v911 = vsel %vm574, %v884, 0
    %913 = vmatprep.subr.mxu0 0.0
    %914 = vmatpush1.xpose.msra.mxu0 %v902
    %915 = vmatprep.subr.mxu0 0.0
    %916 = vmatpush1.xpose.msra.mxu0 %v905
    %917 = vmatprep.subr.mxu0 0.0
    %918 = vmatpush1.xpose.msra.mxu0 %v908
    %919 = vmatprep.subr.mxu0 0.0
    %920 = vmatpush1.xpose.msra.mxu0 %v911
    %921 = vmatprep.subr.mxu0 0.0
    %922 = vmatpush1.xpose.msra.mxu0 0.0
    %923 = vmatprep.subr.mxu0 0.0
    %924 = vmatpush1.xpose.msra.mxu0 0.0
    %925 = vmatprep.subr.mxu0 0.0
    %926 = vmatpush1.xpose.msra.mxu0 0.0
    %927 = vmatprep.subr.mxu0 0.0
    %928 = vmatpush1.xpose.msra.mxu0 0.0
    %929 = vmatprep.subr.mxu0 0.0
    %930 = vmatpush1.xpose.msra.mxu0 0.0
    %931 = vmatprep.subr.mxu0 0.0
    %932 = vmatpush1.xpose.msra.mxu0 0.0
    %933 = vmatprep.subr.mxu0 0.0
    %934 = vmatpush1.xpose.msra.mxu0 0.0
    %935 = vmatprep.subr.mxu0 0.0
    %936 = vmatpush1.xpose.msra.mxu0 0.0
    %937 = vmatprep.subr.mxu0 0.0
    %938 = vmatpush1.xpose.msra.mxu0 0.0
    %939 = vmatprep.subr.mxu0 0.0
    %940 = vmatpush1.xpose.msra.mxu0 0.0
    %941 = vmatprep.subr.mxu0 0.0
    %942 = vmatpush1.xpose.msra.mxu0 0.0
    %943 = vmatprep.subr.mxu0 0.0
    %944 = vmatpush1.xpose.msra.mxu0 0.0
    %945 = vmatprep.subr.mxu0 0.0
    %946 = vmatpush1.xpose.msra.mxu0 0.0
    %947 = vmatprep.subr.mxu0 0.0
    %948 = vmatpush1.xpose.msra.mxu0 0.0
    %949 = vmatprep.subr.mxu0 0.0
    %950 = vmatpush1.xpose.msra.mxu0 0.0
    %951 = vmatprep.subr.mxu0 0.0
    %952 = vmatpush1.xpose.msra.mxu0 0.0
    %953 = vmatprep.subr.mxu0 0.0
    %954 = vmatpush1.xpose.msra.mxu0 0.0
    %955 = vmatprep.subr.mxu0 0.0
    %956 = vmatpush1.xpose.msra.mxu0 0.0
    %957 = vmatprep.subr.mxu0 0.0
    %958 = vmatpush1.xpose.msra.mxu0 0.0
    %959 = vmatprep.subr.mxu0 0.0
    %960 = vmatpush1.xpose.msra.mxu0 0.0
    %961 = vmatprep.subr.mxu0 0.0
    %962 = vmatpush1.xpose.msra.mxu0 0.0
    %963 = vmatprep.subr.mxu0 0.0
    %964 = vmatpush1.xpose.msra.mxu0 0.0
    %965 = vmatprep.subr.mxu0 0.0
    %966 = vmatpush1.xpose.msra.mxu0 0.0
    %967 = vmatprep.subr.mxu0 0.0
    %968 = vmatpush1.xpose.msra.mxu0 0.0
    %969 = vmatprep.subr.mxu0 0.0
    %970 = vmatpush1.xpose.msra.mxu0 0.0
    %971 = vmatprep.subr.mxu0 0.0
    %972 = vmatpush1.xpose.msra.mxu0 0.0
    %973 = vmatprep.subr.mxu0 0.0
    %974 = vmatpush1.xpose.msra.mxu0 0.0
    %975 = vmatprep.subr.mxu0 0.0
    %976 = vmatpush1.xpose.msra.mxu0 0.0
    %977 = vmatprep.mubr.f32.mxu0 0.0
    %978 = vmatmul.mubr.f32.gmra.mrb[0].mxu0 %v890
    %v979 = vpop.f32.mrb[0].mxu0
    %v980 = vadd.f32 0.0, %v979
    %v981 = vpop.f32.mrb[0].mxu0
    %982 = vmatprep.mubr.f32.mxu0 0.0
    %983 = vmatmul.mubr.f32.gmra.mrb[0].mxu0 %v893
    %v984 = vpop.f32.mrb[0].mxu0
    %v985 = vadd.f32 0.0, %v984
    %v986 = vpop.f32.mrb[0].mxu0
    %987 = vmatprep.mubr.f32.mxu0 0.0
    %988 = vmatmul.mubr.f32.gmra.mrb[0].mxu0 %v896
    %v989 = vpop.f32.mrb[0].mxu0
    %v990 = vadd.f32 0.0, %v989
    %v991 = vpop.f32.mrb[0].mxu0
    %992 = vmatprep.mubr.f32.mxu0 0.0
    %993 = vmatmul.mubr.f32.gmra.mrb[0].mxu0 %v899
    %v994 = vpop.f32.mrb[0].mxu0
    %v995 = vadd.f32 0.0, %v994
    %v996 = vpop.f32.mrb[0].mxu0
    %997 = vdwg.mxu0
    %v999 = vsel %vm574, %v524, 0
    %v1002 = vsel %vm574, %v529, 0
    %v1005 = vsel %vm574, %v534, 0
    %v1008 = vsel %vm574, %v539, 0
    %v1011 = vsel %vm574, %v885, 0
    %v1014 = vsel %vm574, %v886, 0
    %v1017 = vsel %vm574, %v887, 0
    %v1020 = vsel %vm574, %v888, 0
    %1022 = vmatprep.subr.mxu0 0.0
    %1023 = vmatpush1.xpose.msra.mxu0 %v1011
    %1024 = vmatprep.subr.mxu0 0.0
    %1025 = vmatpush1.xpose.msra.mxu0 %v1014
    %1026 = vmatprep.subr.mxu0 0.0
    %1027 = vmatpush1.xpose.msra.mxu0 %v1017
    %1028 = vmatprep.subr.mxu0 0.0
    %1029 = vmatpush1.xpose.msra.mxu0 %v1020
    %1030 = vmatprep.subr.mxu0 0.0
    %1031 = vmatpush1.xpose.msra.mxu0 0.0
    %1032 = vmatprep.subr.mxu0 0.0
    %1033 = vmatpush1.xpose.msra.mxu0 0.0
    %1034 = vmatprep.subr.mxu0 0.0
    %1035 = vmatpush1.xpose.msra.mxu0 0.0
    %1036 = vmatprep.subr.mxu0 0.0
    %1037 = vmatpush1.xpose.msra.mxu0 0.0
    %1038 = vmatprep.subr.mxu0 0.0
    %1039 = vmatpush1.xpose.msra.mxu0 0.0
    %1040 = vmatprep.subr.mxu0 0.0
    %1041 = vmatpush1.xpose.msra.mxu0 0.0
    %1042 = vmatprep.subr.mxu0 0.0
    %1043 = vmatpush1.xpose.msra.mxu0 0.0
    %1044 = vmatprep.subr.mxu0 0.0
    %1045 = vmatpush1.xpose.msra.mxu0 0.0
    %1046 = vmatprep.subr.mxu0 0.0
    %1047 = vmatpush1.xpose.msra.mxu0 0.0
    %1048 = vmatprep.subr.mxu0 0.0
    %1049 = vmatpush1.xpose.msra.mxu0 0.0
    %1050 = vmatprep.subr.mxu0 0.0
    %1051 = vmatpush1.xpose.msra.mxu0 0.0
    %1052 = vmatprep.subr.mxu0 0.0
    %1053 = vmatpush1.xpose.msra.mxu0 0.0
    %1054 = vmatprep.subr.mxu0 0.0
    %1055 = vmatpush1.xpose.msra.mxu0 0.0
    %1056 = vmatprep.subr.mxu0 0.0
    %1057 = vmatpush1.xpose.msra.mxu0 0.0
    %1058 = vmatprep.subr.mxu0 0.0
    %1059 = vmatpush1.xpose.msra.mxu0 0.0
    %1060 = vmatprep.subr.mxu0 0.0
    %1061 = vmatpush1.xpose.msra.mxu0 0.0
    %1062 = vmatprep.subr.mxu0 0.0
    %1063 = vmatpush1.xpose.msra.mxu0 0.0
    %1064 = vmatprep.subr.mxu0 0.0
    %1065 = vmatpush1.xpose.msra.mxu0 0.0
    %1066 = vmatprep.subr.mxu0 0.0
    %1067 = vmatpush1.xpose.msra.mxu0 0.0
    %1068 = vmatprep.subr.mxu0 0.0
    %1069 = vmatpush1.xpose.msra.mxu0 0.0
    %1070 = vmatprep.subr.mxu0 0.0
    %1071 = vmatpush1.xpose.msra.mxu0 0.0
    %1072 = vmatprep.subr.mxu0 0.0
    %1073 = vmatpush1.xpose.msra.mxu0 0.0
    %1074 = vmatprep.subr.mxu0 0.0
    %1075 = vmatpush1.xpose.msra.mxu0 0.0
    %1076 = vmatprep.subr.mxu0 0.0
    %1077 = vmatpush1.xpose.msra.mxu0 0.0
    %1078 = vmatprep.subr.mxu0 0.0
    %1079 = vmatpush1.xpose.msra.mxu0 0.0
    %1080 = vmatprep.subr.mxu0 0.0
    %1081 = vmatpush1.xpose.msra.mxu0 0.0
    %1082 = vmatprep.subr.mxu0 0.0
    %1083 = vmatpush1.xpose.msra.mxu0 0.0
    %1084 = vmatprep.subr.mxu0 0.0
    %1085 = vmatpush1.xpose.msra.mxu0 0.0
    %1086 = vmatprep.mubr.f32.mxu0 0.0
    %1087 = vmatmul.mubr.f32.gmra.mrb[0].mxu0 %v999
    %v1088 = vpop.f32.mrb[0].mxu0
    %v1089 = vadd.f32 0.0, %v1088
    %v1090 = vpop.f32.mrb[0].mxu0
    %1091 = vmatprep.mubr.f32.mxu0 0.0
    %1092 = vmatmul.mubr.f32.gmra.mrb[0].mxu0 %v1002
    %v1093 = vpop.f32.mrb[0].mxu0
    %v1094 = vadd.f32 0.0, %v1093
    %v1095 = vpop.f32.mrb[0].mxu0
    %1096 = vmatprep.mubr.f32.mxu0 0.0
    %1097 = vmatmul.mubr.f32.gmra.mrb[0].mxu0 %v1005
    %v1098 = vpop.f32.mrb[0].mxu0
    %v1099 = vadd.f32 0.0, %v1098
    %v1100 = vpop.f32.mrb[0].mxu0
    %1101 = vmatprep.mubr.f32.mxu0 0.0
    %1102 = vmatmul.mubr.f32.gmra.mrb[0].mxu0 %v1008
    %v1103 = vpop.f32.mrb[0].mxu0
    %v1104 = vadd.f32 0.0, %v1103
    %v1105 = vpop.f32.mrb[0].mxu0
    %1106 = vdwg.mxu0
    %1108 = vset.pattern.permute.xlu0 0
    %1109 = vperm.xlu0 %1108, %v140
    %v1110 = vpop.permute.xlu0 %1109
    %vm1112 = vcmask 523264
    %v1114 = vsel %vm1112, %v139, 0
    %1116 = vmatprep.subr.mxu0 0.0
    %1117 = vmatpush1.msra.mxu0 %v980
    %1118 = vmatprep.subr.mxu0 0.0
    %1119 = vmatpush1.msra.mxu0 %v985
    %1120 = vmatprep.subr.mxu0 0.0
    %1121 = vmatpush1.msra.mxu0 %v990
    %1122 = vmatprep.subr.mxu0 0.0
    %1123 = vmatpush1.msra.mxu0 %v995
    %1124 = vmatprep.subr.mxu0 0.0
    %1125 = vmatpush1.msra.mxu0 %v1089
    %1126 = vmatprep.subr.mxu0 0.0
    %1127 = vmatpush1.msra.mxu0 %v1094
    %1128 = vmatprep.subr.mxu0 0.0
    %1129 = vmatpush1.msra.mxu0 %v1099
    %1130 = vmatprep.subr.mxu0 0.0
    %1131 = vmatpush1.msra.mxu0 %v1104
    %1132 = vmatprep.subr.mxu0 0.0
    %1133 = vmatpush1.msra.mxu0 0.0
    %1134 = vmatprep.subr.mxu0 0.0
    %1135 = vmatpush1.msra.mxu0 0.0
    %1136 = vmatprep.subr.mxu0 0.0
    %1137 = vmatpush1.msra.mxu0 0.0
    %1138 = vmatprep.subr.mxu0 0.0
    %1139 = vmatpush1.msra.mxu0 0.0
    %1140 = vmatprep.subr.mxu0 0.0
    %1141 = vmatpush1.msra.mxu0 0.0
    %1142 = vmatprep.subr.mxu0 0.0
    %1143 = vmatpush1.msra.mxu0 0.0
    %1144 = vmatprep.subr.mxu0 0.0
    %1145 = vmatpush1.msra.mxu0 0.0
    %1146 = vmatprep.subr.mxu0 0.0
    %1147 = vmatpush1.msra.mxu0 0.0
    %1148 = vmatprep.subr.mxu0 0.0
    %1149 = vmatpush1.msra.mxu0 0.0
    %1150 = vmatprep.subr.mxu0 0.0
    %1151 = vmatpush1.msra.mxu0 0.0
    %1152 = vmatprep.subr.mxu0 0.0
    %1153 = vmatpush1.msra.mxu0 0.0
    %1154 = vmatprep.subr.mxu0 0.0
    %1155 = vmatpush1.msra.mxu0 0.0
    %1156 = vmatprep.subr.mxu0 0.0
    %1157 = vmatpush1.msra.mxu0 0.0
    %1158 = vmatprep.subr.mxu0 0.0
    %1159 = vmatpush1.msra.mxu0 0.0
    %1160 = vmatprep.subr.mxu0 0.0
    %1161 = vmatpush1.msra.mxu0 0.0
    %1162 = vmatprep.subr.mxu0 0.0
    %1163 = vmatpush1.msra.mxu0 0.0
    %1164 = vmatprep.subr.mxu0 0.0
    %1165 = vmatpush1.msra.mxu0 0.0
    %1166 = vmatprep.subr.mxu0 0.0
    %1167 = vmatpush1.msra.mxu0 0.0
    %1168 = vmatprep.subr.mxu0 0.0
    %1169 = vmatpush1.msra.mxu0 0.0
    %1170 = vmatprep.subr.mxu0 0.0
    %1171 = vmatpush1.msra.mxu0 0.0
    %1172 = vmatprep.subr.mxu0 0.0
    %1173 = vmatpush1.msra.mxu0 0.0
    %1174 = vmatprep.subr.mxu0 0.0
    %1175 = vmatpush1.msra.mxu0 0.0
    %1176 = vmatprep.subr.mxu0 0.0
    %1177 = vmatpush1.msra.mxu0 0.0
    %1178 = vmatprep.subr.mxu0 0.0
    %1179 = vmatpush1.msra.mxu0 0.0
    %1180 = vmatprep.mubr.f32.mxu0 0.0
    %1181 = vmatmul.mubr.f32.gmra.mrb[0].mxu0 %v1114
    %v1182 = vpop.f32.mrb[0].mxu0
    %v1183 = vadd.f32 %v1110, %v1182
    %v1184 = vpop.f32.mrb[0].mxu0
    %1185 = vdwg.mxu0
    %v1186 = vrot.slane %v210, 4
    %v1187 = vsel %vm353, %v1186, 0
    %1189 = vmatprep.subr.mxu0 0.0
    %1190 = vmatpush1.msra.mxu0 %v1187
    %1191 = vmatprep.subr.mxu0 0.0
    %1192 = vmatpush1.msra.mxu0 0.0
    %1193 = vmatprep.subr.mxu0 0.0
    %1194 = vmatpush1.msra.mxu0 0.0
    %1195 = vmatprep.subr.mxu0 0.0
    %1196 = vmatpush1.msra.mxu0 0.0
    %1197 = vmatprep.subr.mxu0 0.0
    %1198 = vmatpush1.msra.mxu0 0.0
    %1199 = vmatprep.subr.mxu0 0.0
    %1200 = vmatpush1.msra.mxu0 0.0
    %1201 = vmatprep.subr.mxu0 0.0
    %1202 = vmatpush1.msra.mxu0 0.0
    %1203 = vmatprep.subr.mxu0 0.0
    %1204 = vmatpush1.msra.mxu0 0.0
    %1205 = vmatprep.subr.mxu0 0.0
    %1206 = vmatpush1.msra.mxu0 0.0
    %1207 = vmatprep.subr.mxu0 0.0
    %1208 = vmatpush1.msra.mxu0 0.0
    %1209 = vmatprep.subr.mxu0 0.0
    %1210 = vmatpush1.msra.mxu0 0.0
    %1211 = vmatprep.subr.mxu0 0.0
    %1212 = vmatpush1.msra.mxu0 0.0
    %1213 = vmatprep.subr.mxu0 0.0
    %1214 = vmatpush1.msra.mxu0 0.0
    %1215 = vmatprep.subr.mxu0 0.0
    %1216 = vmatpush1.msra.mxu0 0.0
    %1217 = vmatprep.subr.mxu0 0.0
    %1218 = vmatpush1.msra.mxu0 0.0
    %1219 = vmatprep.subr.mxu0 0.0
    %1220 = vmatpush1.msra.mxu0 0.0
    %1221 = vmatprep.subr.mxu0 0.0
    %1222 = vmatpush1.msra.mxu0 0.0
    %1223 = vmatprep.subr.mxu0 0.0
    %1224 = vmatpush1.msra.mxu0 0.0
    %1225 = vmatprep.subr.mxu0 0.0
    %1226 = vmatpush1.msra.mxu0 0.0
    %1227 = vmatprep.subr.mxu0 0.0
    %1228 = vmatpush1.msra.mxu0 0.0
    %1229 = vmatprep.subr.mxu0 0.0
    %1230 = vmatpush1.msra.mxu0 0.0
    %1231 = vmatprep.subr.mxu0 0.0
    %1232 = vmatpush1.msra.mxu0 0.0
    %1233 = vmatprep.subr.mxu0 0.0
    %1234 = vmatpush1.msra.mxu0 0.0
    %1235 = vmatprep.subr.mxu0 0.0
    %1236 = vmatpush1.msra.mxu0 0.0
    %1237 = vmatprep.subr.mxu0 0.0
    %1238 = vmatpush1.msra.mxu0 0.0
    %1239 = vmatprep.subr.mxu0 0.0
    %1240 = vmatpush1.msra.mxu0 0.0
    %1241 = vmatprep.subr.mxu0 0.0
    %1242 = vmatpush1.msra.mxu0 0.0
    %1243 = vmatprep.subr.mxu0 0.0
    %1244 = vmatpush1.msra.mxu0 0.0
    %1245 = vmatprep.subr.mxu0 0.0
    %1246 = vmatpush1.msra.mxu0 0.0
    %1247 = vmatprep.subr.mxu0 0.0
    %1248 = vmatpush1.msra.mxu0 0.0
    %1249 = vmatprep.subr.mxu0 0.0
    %1250 = vmatpush1.msra.mxu0 0.0
    %1251 = vmatprep.subr.mxu0 0.0
    %1252 = vmatpush1.msra.mxu0 0.0
    %1253 = vmatprep.mubr.f32.mxu0 0.0
    %1254 = vmatmul.mubr.f32.gmra.mrb[0].mxu0 %v282
    %v1255 = vpop.f32.mrb[0].mxu0
    %v1256 = vadd.f32 0.0, %v1255
    %v1257 = vpop.f32.mrb[0].mxu0
    %1258 = vmatprep.mubr.f32.mxu0 0.0
    %1259 = vmatmul.mubr.f32.gmra.mrb[0].mxu0 %v285
    %v1260 = vpop.f32.mrb[0].mxu0
    %v1261 = vadd.f32 0.0, %v1260
    %v1262 = vpop.f32.mrb[0].mxu0
    %1263 = vmatprep.mubr.f32.mxu0 0.0
    %1264 = vmatmul.mubr.f32.gmra.mrb[0].mxu0 %v288
    %v1265 = vpop.f32.mrb[0].mxu0
    %v1266 = vadd.f32 0.0, %v1265
    %v1267 = vpop.f32.mrb[0].mxu0
    %1268 = vmatprep.mubr.f32.mxu0 0.0
    %1269 = vmatmul.mubr.f32.gmra.mrb[0].mxu0 %v291
    %v1270 = vpop.f32.mrb[0].mxu0
    %v1271 = vadd.f32 0.0, %v1270
    %v1272 = vpop.f32.mrb[0].mxu0
    %1273 = vmatprep.mubr.f32.mxu0 0.0
    %1274 = vmatmul.mubr.f32.gmra.mrb[0].mxu0 %v294
    %v1275 = vpop.f32.mrb[0].mxu0
    %v1276 = vadd.f32 0.0, %v1275
    %v1277 = vpop.f32.mrb[0].mxu0
    %1278 = vmatprep.mubr.f32.mxu0 0.0
    %1279 = vmatmul.mubr.f32.gmra.mrb[0].mxu0 %v297
    %v1280 = vpop.f32.mrb[0].mxu0
    %v1281 = vadd.f32 0.0, %v1280
    %v1282 = vpop.f32.mrb[0].mxu0
    %1283 = vmatprep.mubr.f32.mxu0 0.0
    %1284 = vmatmul.mubr.f32.gmra.mrb[0].mxu0 %v300
    %v1285 = vpop.f32.mrb[0].mxu0
    %v1286 = vadd.f32 0.0, %v1285
    %v1287 = vpop.f32.mrb[0].mxu0
    %1288 = vmatprep.mubr.f32.mxu0 0.0
    %1289 = vmatmul.mubr.f32.gmra.mrb[0].mxu0 %v303
    %v1290 = vpop.f32.mrb[0].mxu0
    %v1291 = vadd.f32 0.0, %v1290
    %v1292 = vpop.f32.mrb[0].mxu0
    %1293 = vmatprep.mubr.f32.mxu0 0.0
    %1294 = vmatmul.mubr.f32.gmra.mrb[0].mxu0 %v306
    %v1295 = vpop.f32.mrb[0].mxu0
    %v1296 = vadd.f32 0.0, %v1295
    %v1297 = vpop.f32.mrb[0].mxu0
    %1298 = vmatprep.mubr.f32.mxu0 0.0
    %1299 = vmatmul.mubr.f32.gmra.mrb[0].mxu0 %v309
    %v1300 = vpop.f32.mrb[0].mxu0
    %v1301 = vadd.f32 0.0, %v1300
    %v1302 = vpop.f32.mrb[0].mxu0
    %1303 = vmatprep.mubr.f32.mxu0 0.0
    %1304 = vmatmul.mubr.f32.gmra.mrb[0].mxu0 %v312
    %v1305 = vpop.f32.mrb[0].mxu0
    %v1306 = vadd.f32 0.0, %v1305
    %v1307 = vpop.f32.mrb[0].mxu0
    %1308 = vmatprep.mubr.f32.mxu0 0.0
    %1309 = vmatmul.mubr.f32.gmra.mrb[0].mxu0 %v315
    %v1310 = vpop.f32.mrb[0].mxu0
    %v1311 = vadd.f32 0.0, %v1310
    %v1312 = vpop.f32.mrb[0].mxu0
    %1313 = vmatprep.mubr.f32.mxu0 0.0
    %1314 = vmatmul.mubr.f32.gmra.mrb[0].mxu0 %v318
    %v1315 = vpop.f32.mrb[0].mxu0
    %v1316 = vadd.f32 0.0, %v1315
    %v1317 = vpop.f32.mrb[0].mxu0
    %1318 = vmatprep.mubr.f32.mxu0 0.0
    %1319 = vmatmul.mubr.f32.gmra.mrb[0].mxu0 %v321
    %v1320 = vpop.f32.mrb[0].mxu0
    %v1321 = vadd.f32 0.0, %v1320
    %v1322 = vpop.f32.mrb[0].mxu0
    %1323 = vmatprep.mubr.f32.mxu0 0.0
    %1324 = vmatmul.mubr.f32.gmra.mrb[0].mxu0 %v324
    %v1325 = vpop.f32.mrb[0].mxu0
    %v1326 = vadd.f32 0.0, %v1325
    %v1327 = vpop.f32.mrb[0].mxu0
    %1328 = vmatprep.mubr.f32.mxu0 0.0
    %1329 = vmatmul.mubr.f32.gmra.mrb[0].mxu0 %v327
    %v1330 = vpop.f32.mrb[0].mxu0
    %v1331 = vadd.f32 0.0, %v1330
    %v1332 = vpop.f32.mrb[0].mxu0
    %1333 = vmatprep.mubr.f32.mxu0 0.0
    %1334 = vmatmul.mubr.f32.gmra.mrb[0].mxu0 %v330
    %v1335 = vpop.f32.mrb[0].mxu0
    %v1336 = vadd.f32 0.0, %v1335
    %v1337 = vpop.f32.mrb[0].mxu0
    %1338 = vmatprep.mubr.f32.mxu0 0.0
    %1339 = vmatmul.mubr.f32.gmra.mrb[0].mxu0 %v333
    %v1340 = vpop.f32.mrb[0].mxu0
    %v1341 = vadd.f32 0.0, %v1340
    %v1342 = vpop.f32.mrb[0].mxu0
    %1343 = vmatprep.mubr.f32.mxu0 0.0
    %1344 = vmatmul.mubr.f32.gmra.mrb[0].mxu0 %v336
    %v1345 = vpop.f32.mrb[0].mxu0
    %v1346 = vadd.f32 0.0, %v1345
    %v1347 = vpop.f32.mrb[0].mxu0
    %1348 = vmatprep.mubr.f32.mxu0 0.0
    %1349 = vmatmul.mubr.f32.gmra.mrb[0].mxu0 %v339
    %v1350 = vpop.f32.mrb[0].mxu0
    %v1351 = vadd.f32 0.0, %v1350
    %v1352 = vpop.f32.mrb[0].mxu0
    %1353 = vmatprep.mubr.f32.mxu0 0.0
    %1354 = vmatmul.mubr.f32.gmra.mrb[0].mxu0 %v342
    %v1355 = vpop.f32.mrb[0].mxu0
    %v1356 = vadd.f32 0.0, %v1355
    %v1357 = vpop.f32.mrb[0].mxu0
    %1358 = vmatprep.mubr.f32.mxu0 0.0
    %1359 = vmatmul.mubr.f32.gmra.mrb[0].mxu0 %v345
    %v1360 = vpop.f32.mrb[0].mxu0
    %v1361 = vadd.f32 0.0, %v1360
    %v1362 = vpop.f32.mrb[0].mxu0
    %1363 = vmatprep.mubr.f32.mxu0 0.0
    %1364 = vmatmul.mubr.f32.gmra.mrb[0].mxu0 %v348
    %v1365 = vpop.f32.mrb[0].mxu0
    %v1366 = vadd.f32 0.0, %v1365
    %v1367 = vpop.f32.mrb[0].mxu0
    %1368 = vmatprep.mubr.f32.mxu0 0.0
    %1369 = vmatmul.mubr.f32.gmra.mrb[0].mxu0 %v351
    %v1370 = vpop.f32.mrb[0].mxu0
    %v1371 = vadd.f32 0.0, %v1370
    %v1372 = vpop.f32.mrb[0].mxu0
    %1373 = vdwg.mxu0
    %1374 = vxpose.xlu0.b32.start [1/16] %v1256, 128
    %1375 = vxpose.xlu0.b32.cont [2/16] %v1261, 128
    %1376 = vxpose.xlu0.b32.cont [3/16] %v1266, 128
    %1377 = vxpose.xlu0.b32.cont [4/16] %v1271, 128
    %1378 = vxpose.xlu0.b32.cont [5/16] 0.0, 128
    %1379 = vxpose.xlu0.b32.cont [6/16] 0.0, 128
    %1380 = vxpose.xlu0.b32.cont [7/16] 0.0, 128
    %1381 = vxpose.xlu0.b32.cont [8/16] 0.0, 128
    %1382 = vxpose.xlu0.b32.cont [9/16] 0.0, 128
    %1383 = vxpose.xlu0.b32.cont [10/16] 0.0, 128
    %1384 = vxpose.xlu0.b32.cont [11/16] 0.0, 128
    %1385 = vxpose.xlu0.b32.cont [12/16] 0.0, 128
    %1386 = vxpose.xlu0.b32.cont [13/16] 0.0, 128
    %1387 = vxpose.xlu0.b32.cont [14/16] 0.0, 128
    %1388 = vxpose.xlu0.b32.cont [15/16] 0.0, 128
    %1389 = vxpose.xlu0.b32.end [16/16] 0.0, 128
    %v1390 = vpop.trf.xlu0
    %v1391 = vpop.trf.xlu0
    %v1392 = vpop.trf.xlu0
    %v1393 = vpop.trf.xlu0
    %v1394 = vpop.trf.xlu0
    %v1395 = vpop.trf.xlu0
    %v1396 = vpop.trf.xlu0
    %v1397 = vpop.trf.xlu0
    %v1398 = vpop.trf.xlu0
    %v1399 = vpop.trf.xlu0
    %v1400 = vpop.trf.xlu0
    %v1401 = vpop.trf.xlu0
    %v1402 = vpop.trf.xlu0
    %v1403 = vpop.trf.xlu0
    %v1404 = vpop.trf.xlu0
    %v1405 = vpop.trf.xlu0
    %v1407 = vsel %vm574, %v1390, 0
    %v1410 = vsel %vm574, %v1391, 0
    %v1413 = vsel %vm574, %v1392, 0
    %v1416 = vsel %vm574, %v1393, 0
    %1418 = vmatprep.subr.mxu0 0.0
    %1419 = vmatpush1.msra.mxu0 %v1296
    %1420 = vmatprep.subr.mxu0 0.0
    %1421 = vmatpush1.msra.mxu0 %v1301
    %1422 = vmatprep.subr.mxu0 0.0
    %1423 = vmatpush1.msra.mxu0 %v1306
    %1424 = vmatprep.subr.mxu0 0.0
    %1425 = vmatpush1.msra.mxu0 %v1311
    %1426 = vmatprep.subr.mxu0 0.0
    %1427 = vmatpush1.msra.mxu0 0.0
    %1428 = vmatprep.subr.mxu0 0.0
    %1429 = vmatpush1.msra.mxu0 0.0
    %1430 = vmatprep.subr.mxu0 0.0
    %1431 = vmatpush1.msra.mxu0 0.0
    %1432 = vmatprep.subr.mxu0 0.0
    %1433 = vmatpush1.msra.mxu0 0.0
    %1434 = vmatprep.subr.mxu0 0.0
    %1435 = vmatpush1.msra.mxu0 0.0
    %1436 = vmatprep.subr.mxu0 0.0
    %1437 = vmatpush1.msra.mxu0 0.0
    %1438 = vmatprep.subr.mxu0 0.0
    %1439 = vmatpush1.msra.mxu0 0.0
    %1440 = vmatprep.subr.mxu0 0.0
    %1441 = vmatpush1.msra.mxu0 0.0
    %1442 = vmatprep.subr.mxu0 0.0
    %1443 = vmatpush1.msra.mxu0 0.0
    %1444 = vmatprep.subr.mxu0 0.0
    %1445 = vmatpush1.msra.mxu0 0.0
    %1446 = vmatprep.subr.mxu0 0.0
    %1447 = vmatpush1.msra.mxu0 0.0
    %1448 = vmatprep.subr.mxu0 0.0
    %1449 = vmatpush1.msra.mxu0 0.0
    %1450 = vmatprep.subr.mxu0 0.0
    %1451 = vmatpush1.msra.mxu0 0.0
    %1452 = vmatprep.subr.mxu0 0.0
    %1453 = vmatpush1.msra.mxu0 0.0
    %1454 = vmatprep.subr.mxu0 0.0
    %1455 = vmatpush1.msra.mxu0 0.0
    %1456 = vmatprep.subr.mxu0 0.0
    %1457 = vmatpush1.msra.mxu0 0.0
    %1458 = vmatprep.subr.mxu0 0.0
    %1459 = vmatpush1.msra.mxu0 0.0
    %1460 = vmatprep.subr.mxu0 0.0
    %1461 = vmatpush1.msra.mxu0 0.0
    %1462 = vmatprep.subr.mxu0 0.0
    %1463 = vmatpush1.msra.mxu0 0.0
    %1464 = vmatprep.subr.mxu0 0.0
    %1465 = vmatpush1.msra.mxu0 0.0
    %1466 = vmatprep.subr.mxu0 0.0
    %1467 = vmatpush1.msra.mxu0 0.0
    %1468 = vmatprep.subr.mxu0 0.0
    %1469 = vmatpush1.msra.mxu0 0.0
    %1470 = vmatprep.subr.mxu0 0.0
    %1471 = vmatpush1.msra.mxu0 0.0
    %1472 = vmatprep.subr.mxu0 0.0
    %1473 = vmatpush1.msra.mxu0 0.0
    %1474 = vmatprep.subr.mxu0 0.0
    %1475 = vmatpush1.msra.mxu0 0.0
    %1476 = vmatprep.subr.mxu0 0.0
    %1477 = vmatpush1.msra.mxu0 0.0
    %1478 = vmatprep.subr.mxu0 0.0
    %1479 = vmatpush1.msra.mxu0 0.0
    %1480 = vmatprep.subr.mxu0 0.0
    %1481 = vmatpush1.msra.mxu0 0.0
    %1482 = vmatprep.mubr.f32.mxu0 0.0
    %1483 = vmatmul.mubr.f32.gmra.mrb[0].mxu0 %v1407
    %v1484 = vpop.f32.mrb[0].mxu0
    %v1485 = vadd.f32 0.0, %v1484
    %v1486 = vpop.f32.mrb[0].mxu0
    %1487 = vmatprep.mubr.f32.mxu0 0.0
    %1488 = vmatmul.mubr.f32.gmra.mrb[0].mxu0 %v1410
    %v1489 = vpop.f32.mrb[0].mxu0
    %v1490 = vadd.f32 0.0, %v1489
    %v1491 = vpop.f32.mrb[0].mxu0
    %1492 = vmatprep.mubr.f32.mxu0 0.0
    %1493 = vmatmul.mubr.f32.gmra.mrb[0].mxu0 %v1413
    %v1494 = vpop.f32.mrb[0].mxu0
    %v1495 = vadd.f32 0.0, %v1494
    %v1496 = vpop.f32.mrb[0].mxu0
    %1497 = vmatprep.mubr.f32.mxu0 0.0
    %1498 = vmatmul.mubr.f32.gmra.mrb[0].mxu0 %v1416
    %v1499 = vpop.f32.mrb[0].mxu0
    %v1500 = vadd.f32 0.0, %v1499
    %v1501 = vpop.f32.mrb[0].mxu0
    %1502 = vdwg.mxu0
    %1503 = vxpose.xlu0.b32.start [1/16] %v1276, 128
    %1504 = vxpose.xlu0.b32.cont [2/16] %v1281, 128
    %1505 = vxpose.xlu0.b32.cont [3/16] %v1286, 128
    %1506 = vxpose.xlu0.b32.cont [4/16] %v1291, 128
    %1507 = vxpose.xlu0.b32.cont [5/16] 0.0, 128
    %1508 = vxpose.xlu0.b32.cont [6/16] 0.0, 128
    %1509 = vxpose.xlu0.b32.cont [7/16] 0.0, 128
    %1510 = vxpose.xlu0.b32.cont [8/16] 0.0, 128
    %1511 = vxpose.xlu0.b32.cont [9/16] 0.0, 128
    %1512 = vxpose.xlu0.b32.cont [10/16] 0.0, 128
    %1513 = vxpose.xlu0.b32.cont [11/16] 0.0, 128
    %1514 = vxpose.xlu0.b32.cont [12/16] 0.0, 128
    %1515 = vxpose.xlu0.b32.cont [13/16] 0.0, 128
    %1516 = vxpose.xlu0.b32.cont [14/16] 0.0, 128
    %1517 = vxpose.xlu0.b32.cont [15/16] 0.0, 128
    %1518 = vxpose.xlu0.b32.end [16/16] 0.0, 128
    %v1519 = vpop.trf.xlu0
    %v1520 = vpop.trf.xlu0
    %v1521 = vpop.trf.xlu0
    %v1522 = vpop.trf.xlu0
    %v1523 = vpop.trf.xlu0
    %v1524 = vpop.trf.xlu0
    %v1525 = vpop.trf.xlu0
    %v1526 = vpop.trf.xlu0
    %v1527 = vpop.trf.xlu0
    %v1528 = vpop.trf.xlu0
    %v1529 = vpop.trf.xlu0
    %v1530 = vpop.trf.xlu0
    %v1531 = vpop.trf.xlu0
    %v1532 = vpop.trf.xlu0
    %v1533 = vpop.trf.xlu0
    %v1534 = vpop.trf.xlu0
    %v1536 = vsel %vm574, %v1519, 0
    %v1539 = vsel %vm574, %v1520, 0
    %v1542 = vsel %vm574, %v1521, 0
    %v1545 = vsel %vm574, %v1522, 0
    %1547 = vmatprep.subr.mxu0 0.0
    %1548 = vmatpush1.msra.mxu0 %v1316
    %1549 = vmatprep.subr.mxu0 0.0
    %1550 = vmatpush1.msra.mxu0 %v1321
    %1551 = vmatprep.subr.mxu0 0.0
    %1552 = vmatpush1.msra.mxu0 %v1326
    %1553 = vmatprep.subr.mxu0 0.0
    %1554 = vmatpush1.msra.mxu0 %v1331
    %1555 = vmatprep.subr.mxu0 0.0
    %1556 = vmatpush1.msra.mxu0 0.0
    %1557 = vmatprep.subr.mxu0 0.0
    %1558 = vmatpush1.msra.mxu0 0.0
    %1559 = vmatprep.subr.mxu0 0.0
    %1560 = vmatpush1.msra.mxu0 0.0
    %1561 = vmatprep.subr.mxu0 0.0
    %1562 = vmatpush1.msra.mxu0 0.0
    %1563 = vmatprep.subr.mxu0 0.0
    %1564 = vmatpush1.msra.mxu0 0.0
    %1565 = vmatprep.subr.mxu0 0.0
    %1566 = vmatpush1.msra.mxu0 0.0
    %1567 = vmatprep.subr.mxu0 0.0
    %1568 = vmatpush1.msra.mxu0 0.0
    %1569 = vmatprep.subr.mxu0 0.0
    %1570 = vmatpush1.msra.mxu0 0.0
    %1571 = vmatprep.subr.mxu0 0.0
    %1572 = vmatpush1.msra.mxu0 0.0
    %1573 = vmatprep.subr.mxu0 0.0
    %1574 = vmatpush1.msra.mxu0 0.0
    %1575 = vmatprep.subr.mxu0 0.0
    %1576 = vmatpush1.msra.mxu0 0.0
    %1577 = vmatprep.subr.mxu0 0.0
    %1578 = vmatpush1.msra.mxu0 0.0
    %1579 = vmatprep.subr.mxu0 0.0
    %1580 = vmatpush1.msra.mxu0 0.0
    %1581 = vmatprep.subr.mxu0 0.0
    %1582 = vmatpush1.msra.mxu0 0.0
    %1583 = vmatprep.subr.mxu0 0.0
    %1584 = vmatpush1.msra.mxu0 0.0
    %1585 = vmatprep.subr.mxu0 0.0
    %1586 = vmatpush1.msra.mxu0 0.0
    %1587 = vmatprep.subr.mxu0 0.0
    %1588 = vmatpush1.msra.mxu0 0.0
    %1589 = vmatprep.subr.mxu0 0.0
    %1590 = vmatpush1.msra.mxu0 0.0
    %1591 = vmatprep.subr.mxu0 0.0
    %1592 = vmatpush1.msra.mxu0 0.0
    %1593 = vmatprep.subr.mxu0 0.0
    %1594 = vmatpush1.msra.mxu0 0.0
    %1595 = vmatprep.subr.mxu0 0.0
    %1596 = vmatpush1.msra.mxu0 0.0
    %1597 = vmatprep.subr.mxu0 0.0
    %1598 = vmatpush1.msra.mxu0 0.0
    %1599 = vmatprep.subr.mxu0 0.0
    %1600 = vmatpush1.msra.mxu0 0.0
    %1601 = vmatprep.subr.mxu0 0.0
    %1602 = vmatpush1.msra.mxu0 0.0
    %1603 = vmatprep.subr.mxu0 0.0
    %1604 = vmatpush1.msra.mxu0 0.0
    %1605 = vmatprep.subr.mxu0 0.0
    %1606 = vmatpush1.msra.mxu0 0.0
    %1607 = vmatprep.subr.mxu0 0.0
    %1608 = vmatpush1.msra.mxu0 0.0
    %1609 = vmatprep.subr.mxu0 0.0
    %1610 = vmatpush1.msra.mxu0 0.0
    %1611 = vmatprep.mubr.f32.mxu0 0.0
    %1612 = vmatmul.mubr.f32.gmra.mrb[0].mxu0 %v1536
    %v1613 = vpop.f32.mrb[0].mxu0
    %v1614 = vadd.f32 0.0, %v1613
    %v1615 = vpop.f32.mrb[0].mxu0
    %1616 = vmatprep.mubr.f32.mxu0 0.0
    %1617 = vmatmul.mubr.f32.gmra.mrb[0].mxu0 %v1539
    %v1618 = vpop.f32.mrb[0].mxu0
    %v1619 = vadd.f32 0.0, %v1618
    %v1620 = vpop.f32.mrb[0].mxu0
    %1621 = vmatprep.mubr.f32.mxu0 0.0
    %1622 = vmatmul.mubr.f32.gmra.mrb[0].mxu0 %v1542
    %v1623 = vpop.f32.mrb[0].mxu0
    %v1624 = vadd.f32 0.0, %v1623
    %v1625 = vpop.f32.mrb[0].mxu0
    %1626 = vmatprep.mubr.f32.mxu0 0.0
    %1627 = vmatmul.mubr.f32.gmra.mrb[0].mxu0 %v1545
    %v1628 = vpop.f32.mrb[0].mxu0
    %v1629 = vadd.f32 0.0, %v1628
    %v1630 = vpop.f32.mrb[0].mxu0
    %1631 = vdwg.mxu0
    %v1632 = vsel %vm574, %v1485, -inf
    %1633 = vmax.xlane.f32.xlu0 %v1632
    %v1634 = vpop.xlane.xlu0 %1633
    %v1635 = vsel %vm574, %v1490, -inf
    %1636 = vmax.xlane.f32.xlu0 %v1635
    %v1637 = vpop.xlane.xlu0 %1636
    %v1638 = vsel %vm574, %v1495, -inf
    %1639 = vmax.xlane.f32.xlu0 %v1638
    %v1640 = vpop.xlane.xlu0 %1639
    %v1641 = vsel %vm574, %v1500, -inf
    %1642 = vmax.xlane.f32.xlu0 %v1641
    %v1643 = vpop.xlane.xlu0 %1642
    %v1644 = vsel %vm574, %v1614, -inf
    %1645 = vmax.xlane.f32.xlu0 %v1644
    %v1646 = vpop.xlane.xlu0 %1645
    %v1647 = vsel %vm574, %v1619, -inf
    %1648 = vmax.xlane.f32.xlu0 %v1647
    %v1649 = vpop.xlane.xlu0 %1648
    %v1650 = vsel %vm574, %v1624, -inf
    %1651 = vmax.xlane.f32.xlu0 %v1650
    %v1652 = vpop.xlane.xlu0 %1651
    %v1653 = vsel %vm574, %v1629, -inf
    %1654 = vmax.xlane.f32.xlu0 %v1653
    %v1655 = vpop.xlane.xlu0 %1654
    %v1656 = vsub.f32 %v1485, %v1634
    %v1657 = vsub.f32 %v1490, %v1637
    %v1658 = vsub.f32 %v1495, %v1640
    %v1659 = vsub.f32 %v1500, %v1643
    %v1660 = vsub.f32 %v1614, %v1646
    %v1661 = vsub.f32 %v1619, %v1649
    %v1662 = vsub.f32 %v1624, %v1652
    %v1663 = vsub.f32 %v1629, %v1655
    %v1664 = vmul.f32 %v1656, 1.442695
    %v1665 = vpow.pop %v1664
    %v1666 = vmul.f32 %v1657, 1.442695
    %v1667 = vpow.pop %v1666
    %v1668 = vmul.f32 %v1658, 1.442695
    %v1669 = vpow.pop %v1668
    %v1670 = vmul.f32 %v1659, 1.442695
    %v1671 = vpow.pop %v1670
    %v1672 = vmul.f32 %v1660, 1.442695
    %v1673 = vpow.pop %v1672
    %v1674 = vmul.f32 %v1661, 1.442695
    %v1675 = vpow.pop %v1674
    %v1676 = vmul.f32 %v1662, 1.442695
    %v1677 = vpow.pop %v1676
    %v1678 = vmul.f32 %v1663, 1.442695
    %v1679 = vpow.pop %v1678
    %v1680 = vsel %vm574, %v1665, 0.0
    %1681 = vadd.xlane.f32.xlu0 %v1680
    %v1682 = vpop.xlane.xlu0 %1681
    %v1683 = vsel %vm574, %v1667, 0.0
    %1684 = vadd.xlane.f32.xlu0 %v1683
    %v1685 = vpop.xlane.xlu0 %1684
    %v1686 = vsel %vm574, %v1669, 0.0
    %1687 = vadd.xlane.f32.xlu0 %v1686
    %v1688 = vpop.xlane.xlu0 %1687
    %v1689 = vsel %vm574, %v1671, 0.0
    %1690 = vadd.xlane.f32.xlu0 %v1689
    %v1691 = vpop.xlane.xlu0 %1690
    %v1692 = vsel %vm574, %v1673, 0.0
    %1693 = vadd.xlane.f32.xlu0 %v1692
    %v1694 = vpop.xlane.xlu0 %1693
    %v1695 = vsel %vm574, %v1675, 0.0
    %1696 = vadd.xlane.f32.xlu0 %v1695
    %v1697 = vpop.xlane.xlu0 %1696
    %v1698 = vsel %vm574, %v1677, 0.0
    %1699 = vadd.xlane.f32.xlu0 %v1698
    %v1700 = vpop.xlane.xlu0 %1699
    %v1701 = vsel %vm574, %v1679, 0.0
    %1702 = vadd.xlane.f32.xlu0 %v1701
    %v1703 = vpop.xlane.xlu0 %1702
    %v1704 = vrcp.pop %v1682
    %v1705 = vrcp.pop %v1685
    %v1706 = vrcp.pop %v1688
    %v1707 = vrcp.pop %v1691
    %v1708 = vrcp.pop %v1694
    %v1709 = vrcp.pop %v1697
    %v1710 = vrcp.pop %v1700
    %v1711 = vrcp.pop %v1703
    %v1712 = vmul.f32 %v1665, %v1704
    %v1713 = vmul.f32 %v1667, %v1705
    %v1714 = vmul.f32 %v1669, %v1706
    %v1715 = vmul.f32 %v1671, %v1707
    %v1716 = vmul.f32 %v1673, %v1708
    %v1717 = vmul.f32 %v1675, %v1709
    %v1718 = vmul.f32 %v1677, %v1710
    %v1719 = vmul.f32 %v1679, %v1711
    %v1721 = vsel %vm574, %v1336, 0
    %v1724 = vsel %vm574, %v1341, 0
    %v1727 = vsel %vm574, %v1346, 0
    %v1730 = vsel %vm574, %v1351, 0
    %v1733 = vsel %vm574, %v1712, 0
    %v1736 = vsel %vm574, %v1713, 0
    %v1739 = vsel %vm574, %v1714, 0
    %v1742 = vsel %vm574, %v1715, 0
    %1744 = vmatprep.subr.mxu0 0.0
    %1745 = vmatpush1.xpose.msra.mxu0 %v1733
    %1746 = vmatprep.subr.mxu0 0.0
    %1747 = vmatpush1.xpose.msra.mxu0 %v1736
    %1748 = vmatprep.subr.mxu0 0.0
    %1749 = vmatpush1.xpose.msra.mxu0 %v1739
    %1750 = vmatprep.subr.mxu0 0.0
    %1751 = vmatpush1.xpose.msra.mxu0 %v1742
    %1752 = vmatprep.subr.mxu0 0.0
    %1753 = vmatpush1.xpose.msra.mxu0 0.0
    %1754 = vmatprep.subr.mxu0 0.0
    %1755 = vmatpush1.xpose.msra.mxu0 0.0
    %1756 = vmatprep.subr.mxu0 0.0
    %1757 = vmatpush1.xpose.msra.mxu0 0.0
    %1758 = vmatprep.subr.mxu0 0.0
    %1759 = vmatpush1.xpose.msra.mxu0 0.0
    %1760 = vmatprep.subr.mxu0 0.0
    %1761 = vmatpush1.xpose.msra.mxu0 0.0
    %1762 = vmatprep.subr.mxu0 0.0
    %1763 = vmatpush1.xpose.msra.mxu0 0.0
    %1764 = vmatprep.subr.mxu0 0.0
    %1765 = vmatpush1.xpose.msra.mxu0 0.0
    %1766 = vmatprep.subr.mxu0 0.0
    %1767 = vmatpush1.xpose.msra.mxu0 0.0
    %1768 = vmatprep.subr.mxu0 0.0
    %1769 = vmatpush1.xpose.msra.mxu0 0.0
    %1770 = vmatprep.subr.mxu0 0.0
    %1771 = vmatpush1.xpose.msra.mxu0 0.0
    %1772 = vmatprep.subr.mxu0 0.0
    %1773 = vmatpush1.xpose.msra.mxu0 0.0
    %1774 = vmatprep.subr.mxu0 0.0
    %1775 = vmatpush1.xpose.msra.mxu0 0.0
    %1776 = vmatprep.subr.mxu0 0.0
    %1777 = vmatpush1.xpose.msra.mxu0 0.0
    %1778 = vmatprep.subr.mxu0 0.0
    %1779 = vmatpush1.xpose.msra.mxu0 0.0
    %1780 = vmatprep.subr.mxu0 0.0
    %1781 = vmatpush1.xpose.msra.mxu0 0.0
    %1782 = vmatprep.subr.mxu0 0.0
    %1783 = vmatpush1.xpose.msra.mxu0 0.0
    %1784 = vmatprep.subr.mxu0 0.0
    %1785 = vmatpush1.xpose.msra.mxu0 0.0
    %1786 = vmatprep.subr.mxu0 0.0
    %1787 = vmatpush1.xpose.msra.mxu0 0.0
    %1788 = vmatprep.subr.mxu0 0.0
    %1789 = vmatpush1.xpose.msra.mxu0 0.0
    %1790 = vmatprep.subr.mxu0 0.0
    %1791 = vmatpush1.xpose.msra.mxu0 0.0
    %1792 = vmatprep.subr.mxu0 0.0
    %1793 = vmatpush1.xpose.msra.mxu0 0.0
    %1794 = vmatprep.subr.mxu0 0.0
    %1795 = vmatpush1.xpose.msra.mxu0 0.0
    %1796 = vmatprep.subr.mxu0 0.0
    %1797 = vmatpush1.xpose.msra.mxu0 0.0
    %1798 = vmatprep.subr.mxu0 0.0
    %1799 = vmatpush1.xpose.msra.mxu0 0.0
    %1800 = vmatprep.subr.mxu0 0.0
    %1801 = vmatpush1.xpose.msra.mxu0 0.0
    %1802 = vmatprep.subr.mxu0 0.0
    %1803 = vmatpush1.xpose.msra.mxu0 0.0
    %1804 = vmatprep.subr.mxu0 0.0
    %1805 = vmatpush1.xpose.msra.mxu0 0.0
    %1806 = vmatprep.subr.mxu0 0.0
    %1807 = vmatpush1.xpose.msra.mxu0 0.0
    %1808 = vmatprep.mubr.f32.mxu0 0.0
    %1809 = vmatmul.mubr.f32.gmra.mrb[0].mxu0 %v1721
    %v1810 = vpop.f32.mrb[0].mxu0
    %v1811 = vadd.f32 0.0, %v1810
    %v1812 = vpop.f32.mrb[0].mxu0
    %1813 = vmatprep.mubr.f32.mxu0 0.0
    %1814 = vmatmul.mubr.f32.gmra.mrb[0].mxu0 %v1724
    %v1815 = vpop.f32.mrb[0].mxu0
    %v1816 = vadd.f32 0.0, %v1815
    %v1817 = vpop.f32.mrb[0].mxu0
    %1818 = vmatprep.mubr.f32.mxu0 0.0
    %1819 = vmatmul.mubr.f32.gmra.mrb[0].mxu0 %v1727
    %v1820 = vpop.f32.mrb[0].mxu0
    %v1821 = vadd.f32 0.0, %v1820
    %v1822 = vpop.f32.mrb[0].mxu0
    %1823 = vmatprep.mubr.f32.mxu0 0.0
    %1824 = vmatmul.mubr.f32.gmra.mrb[0].mxu0 %v1730
    %v1825 = vpop.f32.mrb[0].mxu0
    %v1826 = vadd.f32 0.0, %v1825
    %v1827 = vpop.f32.mrb[0].mxu0
    %1828 = vdwg.mxu0
    %v1830 = vsel %vm574, %v1356, 0
    %v1833 = vsel %vm574, %v1361, 0
    %v1836 = vsel %vm574, %v1366, 0
    %v1839 = vsel %vm574, %v1371, 0
    %v1842 = vsel %vm574, %v1716, 0
    %v1845 = vsel %vm574, %v1717, 0
    %v1848 = vsel %vm574, %v1718, 0
    %v1851 = vsel %vm574, %v1719, 0
    %1853 = vmatprep.subr.mxu0 0.0
    %1854 = vmatpush1.xpose.msra.mxu0 %v1842
    %1855 = vmatprep.subr.mxu0 0.0
    %1856 = vmatpush1.xpose.msra.mxu0 %v1845
    %1857 = vmatprep.subr.mxu0 0.0
    %1858 = vmatpush1.xpose.msra.mxu0 %v1848
    %1859 = vmatprep.subr.mxu0 0.0
    %1860 = vmatpush1.xpose.msra.mxu0 %v1851
    %1861 = vmatprep.subr.mxu0 0.0
    %1862 = vmatpush1.xpose.msra.mxu0 0.0
    %1863 = vmatprep.subr.mxu0 0.0
    %1864 = vmatpush1.xpose.msra.mxu0 0.0
    %1865 = vmatprep.subr.mxu0 0.0
    %1866 = vmatpush1.xpose.msra.mxu0 0.0
    %1867 = vmatprep.subr.mxu0 0.0
    %1868 = vmatpush1.xpose.msra.mxu0 0.0
    %1869 = vmatprep.subr.mxu0 0.0
    %1870 = vmatpush1.xpose.msra.mxu0 0.0
    %1871 = vmatprep.subr.mxu0 0.0
    %1872 = vmatpush1.xpose.msra.mxu0 0.0
    %1873 = vmatprep.subr.mxu0 0.0
    %1874 = vmatpush1.xpose.msra.mxu0 0.0
    %1875 = vmatprep.subr.mxu0 0.0
    %1876 = vmatpush1.xpose.msra.mxu0 0.0
    %1877 = vmatprep.subr.mxu0 0.0
    %1878 = vmatpush1.xpose.msra.mxu0 0.0
    %1879 = vmatprep.subr.mxu0 0.0
    %1880 = vmatpush1.xpose.msra.mxu0 0.0
    %1881 = vmatprep.subr.mxu0 0.0
    %1882 = vmatpush1.xpose.msra.mxu0 0.0
    %1883 = vmatprep.subr.mxu0 0.0
    %1884 = vmatpush1.xpose.msra.mxu0 0.0
    %1885 = vmatprep.subr.mxu0 0.0
    %1886 = vmatpush1.xpose.msra.mxu0 0.0
    %1887 = vmatprep.subr.mxu0 0.0
    %1888 = vmatpush1.xpose.msra.mxu0 0.0
    %1889 = vmatprep.subr.mxu0 0.0
    %1890 = vmatpush1.xpose.msra.mxu0 0.0
    %1891 = vmatprep.subr.mxu0 0.0
    %1892 = vmatpush1.xpose.msra.mxu0 0.0
    %1893 = vmatprep.subr.mxu0 0.0
    %1894 = vmatpush1.xpose.msra.mxu0 0.0
    %1895 = vmatprep.subr.mxu0 0.0
    %1896 = vmatpush1.xpose.msra.mxu0 0.0
    %1897 = vmatprep.subr.mxu0 0.0
    %1898 = vmatpush1.xpose.msra.mxu0 0.0
    %1899 = vmatprep.subr.mxu0 0.0
    %1900 = vmatpush1.xpose.msra.mxu0 0.0
    %1901 = vmatprep.subr.mxu0 0.0
    %1902 = vmatpush1.xpose.msra.mxu0 0.0
    %1903 = vmatprep.subr.mxu0 0.0
    %1904 = vmatpush1.xpose.msra.mxu0 0.0
    %1905 = vmatprep.subr.mxu0 0.0
    %1906 = vmatpush1.xpose.msra.mxu0 0.0
    %1907 = vmatprep.subr.mxu0 0.0
    %1908 = vmatpush1.xpose.msra.mxu0 0.0
    %1909 = vmatprep.subr.mxu0 0.0
    %1910 = vmatpush1.xpose.msra.mxu0 0.0
    %1911 = vmatprep.subr.mxu0 0.0
    %1912 = vmatpush1.xpose.msra.mxu0 0.0
    %1913 = vmatprep.subr.mxu0 0.0
    %1914 = vmatpush1.xpose.msra.mxu0 0.0
    %1915 = vmatprep.subr.mxu0 0.0
    %1916 = vmatpush1.xpose.msra.mxu0 0.0
    %1917 = vmatprep.mubr.f32.mxu0 0.0
    %1918 = vmatmul.mubr.f32.gmra.mrb[0].mxu0 %v1830
    %v1919 = vpop.f32.mrb[0].mxu0
    %v1920 = vadd.f32 0.0, %v1919
    %v1921 = vpop.f32.mrb[0].mxu0
    %1922 = vmatprep.mubr.f32.mxu0 0.0
    %1923 = vmatmul.mubr.f32.gmra.mrb[0].mxu0 %v1833
    %v1924 = vpop.f32.mrb[0].mxu0
    %v1925 = vadd.f32 0.0, %v1924
    %v1926 = vpop.f32.mrb[0].mxu0
    %1927 = vmatprep.mubr.f32.mxu0 0.0
    %1928 = vmatmul.mubr.f32.gmra.mrb[0].mxu0 %v1836
    %v1929 = vpop.f32.mrb[0].mxu0
    %v1930 = vadd.f32 0.0, %v1929
    %v1931 = vpop.f32.mrb[0].mxu0
    %1932 = vmatprep.mubr.f32.mxu0 0.0
    %1933 = vmatmul.mubr.f32.gmra.mrb[0].mxu0 %v1839
    %v1934 = vpop.f32.mrb[0].mxu0
    %v1935 = vadd.f32 0.0, %v1934
    %v1936 = vpop.f32.mrb[0].mxu0
    %1937 = vdwg.mxu0
    %1938 = vmatprep.subr.mxu0 0.0
    %1939 = vmatpush1.msra.mxu0 %v1811
    %1940 = vmatprep.subr.mxu0 0.0
    %1941 = vmatpush1.msra.mxu0 %v1816
    %1942 = vmatprep.subr.mxu0 0.0
    %1943 = vmatpush1.msra.mxu0 %v1821
    %1944 = vmatprep.subr.mxu0 0.0
    %1945 = vmatpush1.msra.mxu0 %v1826
    %1946 = vmatprep.subr.mxu0 0.0
    %1947 = vmatpush1.msra.mxu0 %v1920
    %1948 = vmatprep.subr.mxu0 0.0
    %1949 = vmatpush1.msra.mxu0 %v1925
    %1950 = vmatprep.subr.mxu0 0.0
    %1951 = vmatpush1.msra.mxu0 %v1930
    %1952 = vmatprep.subr.mxu0 0.0
    %1953 = vmatpush1.msra.mxu0 %v1935
    %1954 = vmatprep.subr.mxu0 0.0
    %1955 = vmatpush1.msra.mxu0 0.0
    %1956 = vmatprep.subr.mxu0 0.0
    %1957 = vmatpush1.msra.mxu0 0.0
    %1958 = vmatprep.subr.mxu0 0.0
    %1959 = vmatpush1.msra.mxu0 0.0
    %1960 = vmatprep.subr.mxu0 0.0
    %1961 = vmatpush1.msra.mxu0 0.0
    %1962 = vmatprep.subr.mxu0 0.0
    %1963 = vmatpush1.msra.mxu0 0.0
    %1964 = vmatprep.subr.mxu0 0.0
    %1965 = vmatpush1.msra.mxu0 0.0
    %1966 = vmatprep.subr.mxu0 0.0
    %1967 = vmatpush1.msra.mxu0 0.0
    %1968 = vmatprep.subr.mxu0 0.0
    %1969 = vmatpush1.msra.mxu0 0.0
    %1970 = vmatprep.subr.mxu0 0.0
    %1971 = vmatpush1.msra.mxu0 0.0
    %1972 = vmatprep.subr.mxu0 0.0
    %1973 = vmatpush1.msra.mxu0 0.0
    %1974 = vmatprep.subr.mxu0 0.0
    %1975 = vmatpush1.msra.mxu0 0.0
    %1976 = vmatprep.subr.mxu0 0.0
    %1977 = vmatpush1.msra.mxu0 0.0
    %1978 = vmatprep.subr.mxu0 0.0
    %1979 = vmatpush1.msra.mxu0 0.0
    %1980 = vmatprep.subr.mxu0 0.0
    %1981 = vmatpush1.msra.mxu0 0.0
    %1982 = vmatprep.subr.mxu0 0.0
    %1983 = vmatpush1.msra.mxu0 0.0
    %1984 = vmatprep.subr.mxu0 0.0
    %1985 = vmatpush1.msra.mxu0 0.0
    %1986 = vmatprep.subr.mxu0 0.0
    %1987 = vmatpush1.msra.mxu0 0.0
    %1988 = vmatprep.subr.mxu0 0.0
    %1989 = vmatpush1.msra.mxu0 0.0
    %1990 = vmatprep.subr.mxu0 0.0
    %1991 = vmatpush1.msra.mxu0 0.0
    %1992 = vmatprep.subr.mxu0 0.0
    %1993 = vmatpush1.msra.mxu0 0.0
    %1994 = vmatprep.subr.mxu0 0.0
    %1995 = vmatpush1.msra.mxu0 0.0
    %1996 = vmatprep.subr.mxu0 0.0
    %1997 = vmatpush1.msra.mxu0 0.0
    %1998 = vmatprep.subr.mxu0 0.0
    %1999 = vmatpush1.msra.mxu0 0.0
    %2000 = vmatprep.subr.mxu0 0.0
    %2001 = vmatpush1.msra.mxu0 0.0
    %2002 = vmatprep.mubr.f32.mxu0 0.0
    %2003 = vmatmul.mubr.f32.gmra.mrb[0].mxu0 %v1114
    %v2004 = vpop.f32.mrb[0].mxu0
    %v2005 = vadd.f32 %v1110, %v2004
    %v2006 = vpop.f32.mrb[0].mxu0
    %2007 = vdwg.mxu0
    %v2009 = vrot.slane %v2005, 4
    %v2011 = vsel %vm353, %v1183, %v2009
    %v2013 = vsel %vm574, %v2011, 0
    %2015 = vmatprep.subr.mxu0 %v131
    %2016 = vmatpush1.msra.mxu0 %v130
    %2017 = vmatprep.subr.mxu0 %v133
    %2018 = vmatpush1.msra.mxu0 %v132
    %2019 = vmatprep.subr.mxu0 %v135
    %2020 = vmatpush1.msra.mxu0 %v134
    %2021 = vmatprep.subr.mxu0 %v137
    %2022 = vmatpush1.msra.mxu0 %v136
    %2023 = vmatprep.subr.mxu0 0.0
    %2024 = vmatpush1.msra.mxu0 0.0
    %2025 = vmatprep.subr.mxu0 0.0
    %2026 = vmatpush1.msra.mxu0 0.0
    %2027 = vmatprep.subr.mxu0 0.0
    %2028 = vmatpush1.msra.mxu0 0.0
    %2029 = vmatprep.subr.mxu0 0.0
    %2030 = vmatpush1.msra.mxu0 0.0
    %2031 = vmatprep.subr.mxu0 0.0
    %2032 = vmatpush1.msra.mxu0 0.0
    %2033 = vmatprep.subr.mxu0 0.0
    %2034 = vmatpush1.msra.mxu0 0.0
    %2035 = vmatprep.subr.mxu0 0.0
    %2036 = vmatpush1.msra.mxu0 0.0
    %2037 = vmatprep.subr.mxu0 0.0
    %2038 = vmatpush1.msra.mxu0 0.0
    %2039 = vmatprep.subr.mxu0 0.0
    %2040 = vmatpush1.msra.mxu0 0.0
    %2041 = vmatprep.subr.mxu0 0.0
    %2042 = vmatpush1.msra.mxu0 0.0
    %2043 = vmatprep.subr.mxu0 0.0
    %2044 = vmatpush1.msra.mxu0 0.0
    %2045 = vmatprep.subr.mxu0 0.0
    %2046 = vmatpush1.msra.mxu0 0.0
    %2047 = vmatprep.subr.mxu0 0.0
    %2048 = vmatpush1.msra.mxu0 0.0
    %2049 = vmatprep.subr.mxu0 0.0
    %2050 = vmatpush1.msra.mxu0 0.0
    %2051 = vmatprep.subr.mxu0 0.0
    %2052 = vmatpush1.msra.mxu0 0.0
    %2053 = vmatprep.subr.mxu0 0.0
    %2054 = vmatpush1.msra.mxu0 0.0
    %2055 = vmatprep.subr.mxu0 0.0
    %2056 = vmatpush1.msra.mxu0 0.0
    %2057 = vmatprep.subr.mxu0 0.0
    %2058 = vmatpush1.msra.mxu0 0.0
    %2059 = vmatprep.subr.mxu0 0.0
    %2060 = vmatpush1.msra.mxu0 0.0
    %2061 = vmatprep.subr.mxu0 0.0
    %2062 = vmatpush1.msra.mxu0 0.0
    %2063 = vmatprep.subr.mxu0 0.0
    %2064 = vmatpush1.msra.mxu0 0.0
    %2065 = vmatprep.subr.mxu0 0.0
    %2066 = vmatpush1.msra.mxu0 0.0
    %2067 = vmatprep.subr.mxu0 0.0
    %2068 = vmatpush1.msra.mxu0 0.0
    %2069 = vmatprep.subr.mxu0 0.0
    %2070 = vmatpush1.msra.mxu0 0.0
    %2071 = vmatprep.subr.mxu0 0.0
    %2072 = vmatpush1.msra.mxu0 0.0
    %2073 = vmatprep.subr.mxu0 0.0
    %2074 = vmatpush1.msra.mxu0 0.0
    %2075 = vmatprep.subr.mxu0 0.0
    %2076 = vmatpush1.msra.mxu0 0.0
    %2077 = vmatprep.subr.mxu0 0.0
    %2078 = vmatpush1.msra.mxu0 0.0
    %2079 = vmatprep.mubr.f32.mxu0 0.0
    %2080 = vmatmul.mubr.f32.gmra.mrb[0].mxu0 %v2013
    %v2081 = vpop.f32.mrb[0].mxu0
    %v2082 = vadd.f32 0.0, %v2081
    %v2083 = vpop.f32.mrb[0].mxu0
    %v2084 = vadd.f32 0.0, %v2083
    %2085 = vdwg.mxu0
    %2086 = vst [vmem:[#allocation13] sm:$0xff] %v2082
    %2087 = vst [vmem:[#allocation13 + $0x8] sm:$0xff] %v2084
    // Predicated region
    $region50: #{tpu_custom_call.1} parent=1 // pred_check
      _
    $region51: #{tpu_custom_call.1} parent=1 // pred_check_branch
      %2089 = sbr.rel (0) target = $region53
    $region52: #{tpu_custom_call.1} parent=1 // pred_region
      %s2091 = ssub.s32 256, 256
      %2092 = vsyncadd [#allocation4], %s2091
      %s2094 = sshll.u32 [#allocation13], 4
      %s2095 = int_to_ptr.vmem [resolvable:$true] %s2094
      %2097 = dma.vmem_to_hbm [thread:$0]  %s2095, 256, %s6, [#allocation4]
    $region53: #{tpu_custom_call.1} parent=1 // pred_fallthru
      _
    // Predicated region
    $region54: #{tpu_custom_call.1} parent=1 // pred_check
      _
    $region55: #{tpu_custom_call.1} parent=1 // pred_check_branch
      %2099 = sbr.rel (0) target = $region57
    $region56: #{tpu_custom_call.1} parent=1 // pred_region
      %2100 = dma.done [#allocation4], 256
    $region57: #{tpu_custom_call.1} parent=1 // pred_fallthru
      _
    %2101 = vsyncpa [#allocation3], 1
    %2102 = vsyncpa [#allocation6], 1
    %2103 = vsyncpa [#allocation9], 1
    %2104 = vsyncpa [#allocation12], 1
    %2105 = vsyncpa [#allocation4], 1

</llo_original>
